<compile_context>
chip_gen: v7x
topology: tpu7x:2x2x1
jax: 0.10.0
libtpu: 0.0.40
codegen_flags: <defaults>
</compile_context>

<pallas_src>
import jax
import jax.numpy as jnp
from jax.experimental import pallas as pl
from jax.experimental.pallas import tpu as pltpu

D_IN = 512
D_H = 512
D_MID = 256
D_OUT = 256


def mlp_f2_kernel(x_ref, w1_ref, b1_ref, w2_ref, b2_ref, w3_ref, b3_ref, o_ref):
    # bf16 operands on the MXU, f32 accumulation; bias add / ReLU in f32.
    x = x_ref[...]                                                     # [tb, 512] bf16
    h1 = jnp.dot(x, w1_ref[...], preferred_element_type=jnp.float32) + b1_ref[...]
    h1 = jnp.maximum(h1, 0.0).astype(jnp.bfloat16)                     # [tb, 512]
    h2 = jnp.dot(h1, w2_ref[...], preferred_element_type=jnp.float32) + b2_ref[...]
    h2 = jnp.maximum(h2, 0.0).astype(jnp.bfloat16)                     # [tb, 256]
    h3 = jnp.dot(h2, w3_ref[...], preferred_element_type=jnp.float32) + b3_ref[...]
    o_ref[...] = h3.astype(o_ref.dtype)                                # [tb, 256] f32


def _round_up(n, m):
    return ((n + m - 1) // m) * m


def _default_tile_b():
    """Generation-aware batch tile: multiple of 256 (v6e/v7x MXU) or 128 (v5e)."""
    try:
        kind = jax.devices()[0].device_kind.lower()
    except Exception:
        kind = ""
    # v5e: 4x128x128 MXU, 16 MiB default scoped VMEM -> 256-row tiles.
    # v6e/v7x: 2x256x256 MXU, 32 MiB scoped VMEM -> 512-row tiles.
    return 256 if "v5" in kind else 512


def mlp_f2_forward(x, params, *, tile_b=None):
    """x: [..., 512] float -> [N, 256] float32 (N = prod of leading dims)."""
    w1, b1, w2, b2, w3, b3 = params

    x = x.reshape(-1, D_IN)
    B = x.shape[0]

    if tile_b is None:
        tile_b = _default_tile_b()
    # Don't over-pad tiny batches; keep the sublane dim a multiple of 8.
    tile_b = max(8, min(tile_b, _round_up(B, 8)))

    n_tiles = pl.cdiv(B, tile_b)
    b_pad = n_tiles * tile_b

    x = x.astype(jnp.bfloat16)
    if b_pad != B:
        x = jnp.pad(x, ((0, b_pad - B), (0, 0)))

    full = lambda shape: pl.BlockSpec(shape, lambda i: (0, 0))

    out = pl.pallas_call(
        mlp_f2_kernel,
        out_shape=jax.ShapeDtypeStruct((b_pad, D_OUT), jnp.float32),
        grid_spec=pltpu.PrefetchScalarGridSpec(
            num_scalar_prefetch=0,
            grid=(n_tiles,),
            in_specs=[
                pl.BlockSpec((tile_b, D_IN), lambda i: (i, 0)),  # streamed x tile
                full((D_IN, D_H)),                               # W1 (resident)
                full((1, D_H)),                                  # b1
                full((D_H, D_MID)),                              # W2
                full((1, D_MID)),                                # b2
                full((D_MID, D_OUT)),                            # W3
                full((1, D_OUT)),                                # b3
            ],
            out_specs=pl.BlockSpec((tile_b, D_OUT), lambda i: (i, 0)),
        ),
        compiler_params=pltpu.CompilerParams(
            dimension_semantics=("parallel",),      # megacore-shardable batch axis
            vmem_limit_bytes=32 * 1024 * 1024,      # safe on v5e/v6e/v7x; >> footprint
        ),
    )(x, w1, b1, w2, b2, w3, b3)

    if b_pad != B:
        out = out[:B]
    # Equivalent of x.view(-1, 256) -- already [N, 256].
    return out


def init_params(key):
    """Deterministic synthetic parameters (shapes match the nn.Linear layers).

    Weights stored [in, out] (transpose of PyTorch) in bf16; biases [1, out] f32.
    """
    k1, k2, k3, k4, k5, k6 = jax.random.split(key, 6)
    w1 = (jax.random.normal(k1, (D_IN, D_H), jnp.float32) / jnp.sqrt(D_IN)).astype(jnp.bfloat16)
    b1 = jax.random.normal(k2, (1, D_H), jnp.float32) * 0.01
    w2 = (jax.random.normal(k3, (D_H, D_MID), jnp.float32) / jnp.sqrt(D_H)).astype(jnp.bfloat16)
    b2 = jax.random.normal(k4, (1, D_MID), jnp.float32) * 0.01
    w3 = (jax.random.normal(k5, (D_MID, D_OUT), jnp.float32) / jnp.sqrt(D_MID)).astype(jnp.bfloat16)
    b3 = jax.random.normal(k6, (1, D_OUT), jnp.float32) * 0.01
    return (w1, b1, w2, b2, w3, b3)


def reference_forward(x, params):
    """Pure-JAX reference mirroring the kernel math (bf16 operands, f32 accum)."""
    w1, b1, w2, b2, w3, b3 = params
    x = x.reshape(-1, D_IN).astype(jnp.bfloat16)
    h = jnp.maximum(jnp.dot(x, w1, preferred_element_type=jnp.float32) + b1, 0.0)
    h = jnp.maximum(
        jnp.dot(h.astype(jnp.bfloat16), w2, preferred_element_type=jnp.float32) + b2, 0.0
    )
    h = jnp.dot(h.astype(jnp.bfloat16), w3, preferred_element_type=jnp.float32) + b3
    return h.reshape(-1, D_OUT)


if __name__ == "__main__":
    key = jax.random.PRNGKey(0)
    kx, kp, kx2 = jax.random.split(key, 3)
    params = init_params(kp)

    # Small demo batch (single grid step, block == full padded array).
    x_small = jax.random.normal(kx, (8, D_IN), jnp.float32)
    out = jax.block_until_ready(mlp_f2_forward(x_small, params))
    ref = reference_forward(x_small, params)
    assert out.shape == (8, D_OUT), out.shape
    assert jnp.allclose(out, ref, atol=1e-2, rtol=1e-2), "mismatch vs reference (small)"

    # Ragged batch exercising the cdiv/pad path and a multi-step pipelined grid.
    x_big = jax.random.normal(kx2, (1000, D_IN), jnp.float32)
    out_big = jax.block_until_ready(mlp_f2_forward(x_big, params))
    ref_big = reference_forward(x_big, params)
    assert out_big.shape == (1000, D_OUT), out_big.shape
    assert jnp.allclose(out_big, ref_big, atol=1e-2, rtol=1e-2), "mismatch vs reference (big)"

    print("KERNEL_OK")
</pallas_src>

<mosaic_0001>
module attributes {stable_mosaic.version = 11 : i64} {
  func.func @mlp_f2_kernel(%arg0: i32, %arg1: memref<8x512xbf16, #tpu.memory_space<vmem>>, %arg2: memref<512x512xbf16, #tpu.memory_space<vmem>>, %arg3: memref<1x512xf32, #tpu.memory_space<vmem>>, %arg4: memref<512x256xbf16, #tpu.memory_space<vmem>>, %arg5: memref<1x256xf32, #tpu.memory_space<vmem>>, %arg6: memref<256x256xbf16, #tpu.memory_space<vmem>>, %arg7: memref<1x256xf32, #tpu.memory_space<vmem>>, %arg8: memref<8x256xf32, #tpu.memory_space<vmem>>) attributes {dimension_semantics = [#tpu.dimension_semantics<parallel>], iteration_bounds = array<i64: 1>, scalar_prefetch = 0 : i64, scratch_operands = 0 : i64, tpu.core_type = #tpu.core_type<tc>, window_params = [{transform_indices = @transform_0, window_bounds = array<i64: 8, 512>}, {pipeline_mode = #tpu.pipeline_mode<synchronous>, transform_indices = @transform_1, window_bounds = array<i64: 512, 512>}, {pipeline_mode = #tpu.pipeline_mode<synchronous>, transform_indices = @transform_2, window_bounds = array<i64: 1, 512>}, {pipeline_mode = #tpu.pipeline_mode<synchronous>, transform_indices = @transform_3, window_bounds = array<i64: 512, 256>}, {pipeline_mode = #tpu.pipeline_mode<synchronous>, transform_indices = @transform_4, window_bounds = array<i64: 1, 256>}, {pipeline_mode = #tpu.pipeline_mode<synchronous>, transform_indices = @transform_5, window_bounds = array<i64: 256, 256>}, {pipeline_mode = #tpu.pipeline_mode<synchronous>, transform_indices = @transform_6, window_bounds = array<i64: 1, 256>}, {transform_indices = @transform_7, window_bounds = array<i64: 8, 256>}]} {
    %c0 = arith.constant 0 : index
    %c0_0 = arith.constant 0 : index
    %0 = vector.load %arg1[%c0, %c0_0] : memref<8x512xbf16, #tpu.memory_space<vmem>>, vector<8x512xbf16>
    %c0_1 = arith.constant 0 : index
    %c0_2 = arith.constant 0 : index
    %1 = vector.load %arg2[%c0_1, %c0_2] : memref<512x512xbf16, #tpu.memory_space<vmem>>, vector<512x512xbf16>
    %cst = arith.constant dense<0.000000e+00> : vector<8x512xf32>
    %2 = tpu.matmul %0, %1, %cst {dimension_numbers = #tpu.dot_dimension_numbers<[1], [0], [0], [1], [0, 0, 1, 1], [], []>} : vector<8x512xbf16>, vector<512x512xbf16>, vector<8x512xf32> -> vector<8x512xf32>
    %c0_3 = arith.constant 0 : index
    %c0_4 = arith.constant 0 : index
    %3 = vector.load %arg3[%c0_3, %c0_4] : memref<1x512xf32, #tpu.memory_space<vmem>>, vector<1x512xf32>
    %4 = vector.broadcast %3 : vector<1x512xf32> to vector<8x512xf32>
    %5 = arith.addf %2, %4 : vector<8x512xf32>
    %cst_5 = arith.constant 0.000000e+00 : f32
    %6 = vector.broadcast %cst_5 : f32 to vector<8x512xf32>
    %7 = arith.maximumf %5, %6 : vector<8x512xf32>
    %8 = arith.truncf %7 : vector<8x512xf32> to vector<8x512xbf16>
    %c0_6 = arith.constant 0 : index
    %c0_7 = arith.constant 0 : index
    %9 = vector.load %arg4[%c0_6, %c0_7] : memref<512x256xbf16, #tpu.memory_space<vmem>>, vector<512x256xbf16>
    %cst_8 = arith.constant dense<0.000000e+00> : vector<8x256xf32>
    %10 = tpu.matmul %8, %9, %cst_8 {dimension_numbers = #tpu.dot_dimension_numbers<[1], [0], [0], [1], [0, 0, 1, 1], [], []>} : vector<8x512xbf16>, vector<512x256xbf16>, vector<8x256xf32> -> vector<8x256xf32>
    %c0_9 = arith.constant 0 : index
    %c0_10 = arith.constant 0 : index
    %11 = vector.load %arg5[%c0_9, %c0_10] : memref<1x256xf32, #tpu.memory_space<vmem>>, vector<1x256xf32>
    %12 = vector.broadcast %11 : vector<1x256xf32> to vector<8x256xf32>
    %13 = arith.addf %10, %12 : vector<8x256xf32>
    %cst_11 = arith.constant 0.000000e+00 : f32
    %14 = vector.broadcast %cst_11 : f32 to vector<8x256xf32>
    %15 = arith.maximumf %13, %14 : vector<8x256xf32>
    %16 = arith.truncf %15 : vector<8x256xf32> to vector<8x256xbf16>
    %c0_12 = arith.constant 0 : index
    %c0_13 = arith.constant 0 : index
    %17 = vector.load %arg6[%c0_12, %c0_13] : memref<256x256xbf16, #tpu.memory_space<vmem>>, vector<256x256xbf16>
    %cst_14 = arith.constant dense<0.000000e+00> : vector<8x256xf32>
    %18 = tpu.matmul %16, %17, %cst_14 {dimension_numbers = #tpu.dot_dimension_numbers<[1], [0], [0], [1], [0, 0, 1, 1], [], []>} : vector<8x256xbf16>, vector<256x256xbf16>, vector<8x256xf32> -> vector<8x256xf32>
    %c0_15 = arith.constant 0 : index
    %c0_16 = arith.constant 0 : index
    %19 = vector.load %arg7[%c0_15, %c0_16] : memref<1x256xf32, #tpu.memory_space<vmem>>, vector<1x256xf32>
    %20 = vector.broadcast %19 : vector<1x256xf32> to vector<8x256xf32>
    %21 = arith.addf %18, %20 : vector<8x256xf32>
    %c0_17 = arith.constant 0 : index
    %c0_18 = arith.constant 0 : index
    %22 = vector.load %arg8[%c0_17, %c0_18] : memref<8x256xf32, #tpu.memory_space<vmem>>, vector<8x256xf32>
    tpu.vector_store %arg8[%c0_17, %c0_18], %21 {strides = array<i32>} : memref<8x256xf32, #tpu.memory_space<vmem>>, vector<8x256xf32>,
    return
  }
  func.func @transform_0(%arg0: i32) -> (i32, i32) {
    %c0_i32 = arith.constant 0 : i32
    %c0_i32_0 = arith.constant 0 : i32
    return %arg0, %c0_i32 : i32, i32
  }
  func.func @transform_1(%arg0: i32) -> (i32, i32) {
    %c0_i32 = arith.constant 0 : i32
    %c0_i32_0 = arith.constant 0 : i32
    %c0_i32_1 = arith.constant 0 : i32
    return %c0_i32, %c0_i32_0 : i32, i32
  }
  func.func @transform_2(%arg0: i32) -> (i32, i32) {
    %c0_i32 = arith.constant 0 : i32
    %c0_i32_0 = arith.constant 0 : i32
    %c0_i32_1 = arith.constant 0 : i32
    return %c0_i32, %c0_i32_0 : i32, i32
  }
  func.func @transform_3(%arg0: i32) -> (i32, i32) {
    %c0_i32 = arith.constant 0 : i32
    %c0_i32_0 = arith.constant 0 : i32
    %c0_i32_1 = arith.constant 0 : i32
    return %c0_i32, %c0_i32_0 : i32, i32
  }
  func.func @transform_4(%arg0: i32) -> (i32, i32) {
    %c0_i32 = arith.constant 0 : i32
    %c0_i32_0 = arith.constant 0 : i32
    %c0_i32_1 = arith.constant 0 : i32
    return %c0_i32, %c0_i32_0 : i32, i32
  }
  func.func @transform_5(%arg0: i32) -> (i32, i32) {
    %c0_i32 = arith.constant 0 : i32
    %c0_i32_0 = arith.constant 0 : i32
    %c0_i32_1 = arith.constant 0 : i32
    return %c0_i32, %c0_i32_0 : i32, i32
  }
  func.func @transform_6(%arg0: i32) -> (i32, i32) {
    %c0_i32 = arith.constant 0 : i32
    %c0_i32_0 = arith.constant 0 : i32
    %c0_i32_1 = arith.constant 0 : i32
    return %c0_i32, %c0_i32_0 : i32, i32
  }
  func.func @transform_7(%arg0: i32) -> (i32, i32) {
    %c0_i32 = arith.constant 0 : i32
    %c0_i32_0 = arith.constant 0 : i32
    return %arg0, %c0_i32 : i32, i32
  }
}

</mosaic_0001>

<llo_original>
// kernel: tpu_custom_call.1
$region0: #{tpu_custom_call.1}
  #allocation0 [shape = 'u32[]', space=smem, size = 0x4, offset = 0x4, fixed_abs, tag = 'smem constant byte address 0x4 - core index']
  #allocation1 [shape = 'u32[144,128]{1,0:T(1,128)}', space=vmem, size = 0x12000, scoped, tag = 'internal scratch']
  %s0 = inlined_call_operand.hbm [shape: bf16[8,512], index: 0, kind: input, shape index: {}]
  %s1 = inlined_call_operand.hbm [shape: bf16[512,512], index: 1, kind: input, shape index: {}]
  %s2 = inlined_call_operand.vmem [shape: f32[1,512], index: 2, kind: input, shape index: {}]
  %s3 = inlined_call_operand.hbm [shape: bf16[512,256], index: 3, kind: input, shape index: {}]
  %s4 = inlined_call_operand.vmem [shape: f32[1,256], index: 4, kind: input, shape index: {}]
  %s5 = inlined_call_operand.hbm [shape: bf16[256,256], index: 5, kind: input, shape index: {}]
  %s6 = inlined_call_operand.vmem [shape: f32[1,256], index: 6, kind: input, shape index: {}]
  %s7 = inlined_call_operand.hbm [shape: f32[8,256], index: 7, kind: output, shape index: {}]
  %s8 = sld [smem:[#allocation0]]
  $region54: #{tpu_custom_call.1} parent=0
    _
  %s10 = ssub.s32 1, %s8
  %s11 = scalar_select 0, %s10, %s8
  $region1: #{tpu_custom_call.1} parent=0
    #allocation2 [shape = 'u8[8192]{0}', space=vmem, size = 0x2000, scoped, tag = 'input window, operand 0, single buffered']
    #allocation3 [shape = 's32[1]{0}', space=sflag, size = 0x4, scoped, tag = 'scoped memory for tpu_custom_call.1']
    #allocation4 [shape = 's32[1]{0}', space=sflag, size = 0x4, scoped, tag = 'scoped memory for tpu_custom_call.1']
    #allocation5 [shape = 'u8[524288]{0}', space=vmem, size = 0x80000, scoped, tag = 'input window, operand 1, single buffered']
    #allocation6 [shape = 's32[1]{0}', space=sflag, size = 0x4, scoped, tag = 'scoped memory for tpu_custom_call.1']
    #allocation7 [shape = 'u8[262144]{0}', space=vmem, size = 0x40000, scoped, tag = 'input window, operand 3, single buffered']
    #allocation8 [shape = 'u8[131072]{0}', space=vmem, size = 0x20000, scoped, tag = 'input window, operand 5, single buffered']
    #allocation9 [shape = 's32[1]{0}', space=sflag, size = 0x4, scoped, tag = 'scoped memory for tpu_custom_call.1']
    #allocation10 [shape = 'u8[8192]{0}', space=vmem, size = 0x2000, scoped, tag = 'output window, operand 0, single buffered']
    %12 = vsyncpa [#allocation3], 0
    %13 = vsyncpa [#allocation6], 0
    %14 = vsyncpa [#allocation9], 0
    %15 = vsyncpa [#allocation4], 0
    // Predicated region
    $region2: #{tpu_custom_call.1} parent=1 // pred_check
      _
    $region3: #{tpu_custom_call.1} parent=1 // pred_check_branch
      %17 = sbr.rel (0) target = $region5
    $region4: #{tpu_custom_call.1} parent=1 // pred_region
      %s19 = ssub.s32 256, 256
      %20 = vsyncadd [#allocation3], %s19
      %s22 = sshll.u32 [#allocation2], 4
      %s23 = int_to_ptr.vmem [resolvable:$true] %s22
      %25 = dma.hbm_to_vmem [thread:$0]  %s0, 256, %s23, [#allocation3]
    $region5: #{tpu_custom_call.1} parent=1 // pred_fallthru
      _
    // Predicated region
    $region6: #{tpu_custom_call.1} parent=1 // pred_check
      _
    $region7: #{tpu_custom_call.1} parent=1 // pred_check_branch
      %27 = sbr.rel (0) target = $region9
    $region8: #{tpu_custom_call.1} parent=1 // pred_region
      %s29 = ssub.s32 16384, 16384
      %30 = vsyncadd [#allocation6], %s29
      %s31 = sshll.u32 [#allocation5], 4
      %s32 = int_to_ptr.vmem [resolvable:$true] %s31
      %37 = dma.hbm_to_vmem [thread:$0]  %s1, 16384, %s32, [#allocation6], 256, 256, 16
    $region9: #{tpu_custom_call.1} parent=1 // pred_fallthru
      _
    // Predicated region
    $region10: #{tpu_custom_call.1} parent=1 // pred_check
      _
    $region11: #{tpu_custom_call.1} parent=1 // pred_check_branch
      %39 = sbr.rel (0) target = $region13
    $region12: #{tpu_custom_call.1} parent=1 // pred_region
      _
    $region13: #{tpu_custom_call.1} parent=1 // pred_fallthru
      _
    // Predicated region
    $region14: #{tpu_custom_call.1} parent=1 // pred_check
      _
    $region15: #{tpu_custom_call.1} parent=1 // pred_check_branch
      %41 = sbr.rel (0) target = $region17
    $region16: #{tpu_custom_call.1} parent=1 // pred_region
      %s43 = ssub.s32 8192, 8192
      %44 = vsyncadd [#allocation6], %s43
      %s45 = sshll.u32 [#allocation7], 4
      %s46 = int_to_ptr.vmem [resolvable:$true] %s45
      %51 = dma.hbm_to_vmem [thread:$0]  %s3, 8192, %s46, [#allocation6], 128, 128, 8
    $region17: #{tpu_custom_call.1} parent=1 // pred_fallthru
      _
    // Predicated region
    $region18: #{tpu_custom_call.1} parent=1 // pred_check
      _
    $region19: #{tpu_custom_call.1} parent=1 // pred_check_branch
      %53 = sbr.rel (0) target = $region21
    $region20: #{tpu_custom_call.1} parent=1 // pred_region
      _
    $region21: #{tpu_custom_call.1} parent=1 // pred_fallthru
      _
    // Predicated region
    $region22: #{tpu_custom_call.1} parent=1 // pred_check
      _
    $region23: #{tpu_custom_call.1} parent=1 // pred_check_branch
      %55 = sbr.rel (0) target = $region25
    $region24: #{tpu_custom_call.1} parent=1 // pred_region
      %s57 = ssub.s32 4096, 4096
      %58 = vsyncadd [#allocation9], %s57
      %s59 = sshll.u32 [#allocation8], 4
      %s60 = int_to_ptr.vmem [resolvable:$true] %s59
      %65 = dma.hbm_to_vmem [thread:$0]  %s5, 4096, %s60, [#allocation9], 128, 128, 8
    $region25: #{tpu_custom_call.1} parent=1 // pred_fallthru
      _
    // Predicated region
    $region26: #{tpu_custom_call.1} parent=1 // pred_check
      _
    $region27: #{tpu_custom_call.1} parent=1 // pred_check_branch
      %67 = sbr.rel (0) target = $region29
    $region28: #{tpu_custom_call.1} parent=1 // pred_region
      _
    $region29: #{tpu_custom_call.1} parent=1 // pred_fallthru
      _
    // Predicated region
    $region30: #{tpu_custom_call.1} parent=1 // pred_check
      _
    $region31: #{tpu_custom_call.1} parent=1 // pred_check_branch
      %69 = sbr.rel (0) target = $region33
    $region32: #{tpu_custom_call.1} parent=1 // pred_region
      %70 = dma.done [#allocation3], 256
    $region33: #{tpu_custom_call.1} parent=1 // pred_fallthru
      _
    // Predicated region
    $region34: #{tpu_custom_call.1} parent=1 // pred_check
      _
    $region35: #{tpu_custom_call.1} parent=1 // pred_check_branch
      %72 = sbr.rel (0) target = $region37
    $region36: #{tpu_custom_call.1} parent=1 // pred_region
      %73 = dma.done [#allocation6], 16384
    $region37: #{tpu_custom_call.1} parent=1 // pred_fallthru
      _
    // Predicated region
    $region38: #{tpu_custom_call.1} parent=1 // pred_check
      _
    $region39: #{tpu_custom_call.1} parent=1 // pred_check_branch
      %75 = sbr.rel (0) target = $region41
    $region40: #{tpu_custom_call.1} parent=1 // pred_region
      %76 = dma.done [#allocation6], 8192
    $region41: #{tpu_custom_call.1} parent=1 // pred_fallthru
      _
    // Predicated region
    $region42: #{tpu_custom_call.1} parent=1 // pred_check
      _
    $region43: #{tpu_custom_call.1} parent=1 // pred_check_branch
      %78 = sbr.rel (0) target = $region45
    $region44: #{tpu_custom_call.1} parent=1 // pred_region
      %79 = dma.done [#allocation9], 4096
    $region45: #{tpu_custom_call.1} parent=1 // pred_fallthru
      _
    %v80 = vld [vmem:[#allocation2] sm:$0xff]
    %v81 = vld [vmem:[#allocation2 + $0x8] sm:$0xff]
    %v82 = vld [vmem:[#allocation5] sm:$0xff]
    %v83 = vld [vmem:[#allocation5 + $0x8] sm:$0xff]
    %v84 = vld [vmem:[#allocation5 + $0x10] sm:$0xff]
    %v85 = vld [vmem:[#allocation5 + $0x18] sm:$0xff]
    %v86 = vld [vmem:[#allocation5 + $0x20] sm:$0xff]
    %v87 = vld [vmem:[#allocation5 + $0x28] sm:$0xff]
    %v88 = vld [vmem:[#allocation5 + $0x30] sm:$0xff]
    %v89 = vld [vmem:[#allocation5 + $0x38] sm:$0xff]
    %v90 = vld [vmem:[#allocation5 + $0x40] sm:$0xff]
    %v91 = vld [vmem:[#allocation5 + $0x48] sm:$0xff]
    %v92 = vld [vmem:[#allocation5 + $0x50] sm:$0xff]
    %v93 = vld [vmem:[#allocation5 + $0x58] sm:$0xff]
    %v94 = vld [vmem:[#allocation5 + $0x60] sm:$0xff]
    %v95 = vld [vmem:[#allocation5 + $0x68] sm:$0xff]
    %v96 = vld [vmem:[#allocation5 + $0x70] sm:$0xff]
    %v97 = vld [vmem:[#allocation5 + $0x78] sm:$0xff]
    %v98 = vld [vmem:[#allocation5 + $0x80] sm:$0xff]
    %v99 = vld [vmem:[#allocation5 + $0x88] sm:$0xff]
    %v100 = vld [vmem:[#allocation5 + $0x90] sm:$0xff]
    %v101 = vld [vmem:[#allocation5 + $0x98] sm:$0xff]
    %v102 = vld [vmem:[#allocation5 + $0xa0] sm:$0xff]
    %v103 = vld [vmem:[#allocation5 + $0xa8] sm:$0xff]
    %v104 = vld [vmem:[#allocation5 + $0xb0] sm:$0xff]
    %v105 = vld [vmem:[#allocation5 + $0xb8] sm:$0xff]
    %v106 = vld [vmem:[#allocation5 + $0xc0] sm:$0xff]
    %v107 = vld [vmem:[#allocation5 + $0xc8] sm:$0xff]
    %v108 = vld [vmem:[#allocation5 + $0xd0] sm:$0xff]
    %v109 = vld [vmem:[#allocation5 + $0xd8] sm:$0xff]
    %v110 = vld [vmem:[#allocation5 + $0xe0] sm:$0xff]
    %v111 = vld [vmem:[#allocation5 + $0xe8] sm:$0xff]
    %v112 = vld [vmem:[#allocation5 + $0xf0] sm:$0xff]
    %v113 = vld [vmem:[#allocation5 + $0xf8] sm:$0xff]
    %v114 = vld [vmem:[#allocation5 + $0x100] sm:$0xff]
    %v115 = vld [vmem:[#allocation5 + $0x108] sm:$0xff]
    %v116 = vld [vmem:[#allocation5 + $0x110] sm:$0xff]
    %v117 = vld [vmem:[#allocation5 + $0x118] sm:$0xff]
    %v118 = vld [vmem:[#allocation5 + $0x120] sm:$0xff]
    %v119 = vld [vmem:[#allocation5 + $0x128] sm:$0xff]
    %v120 = vld [vmem:[#allocation5 + $0x130] sm:$0xff]
    %v121 = vld [vmem:[#allocation5 + $0x138] sm:$0xff]
    %v122 = vld [vmem:[#allocation5 + $0x140] sm:$0xff]
    %v123 = vld [vmem:[#allocation5 + $0x148] sm:$0xff]
    %v124 = vld [vmem:[#allocation5 + $0x150] sm:$0xff]
    %v125 = vld [vmem:[#allocation5 + $0x158] sm:$0xff]
    %v126 = vld [vmem:[#allocation5 + $0x160] sm:$0xff]
    %v127 = vld [vmem:[#allocation5 + $0x168] sm:$0xff]
    %v128 = vld [vmem:[#allocation5 + $0x170] sm:$0xff]
    %v129 = vld [vmem:[#allocation5 + $0x178] sm:$0xff]
    %v130 = vld [vmem:[#allocation5 + $0x180] sm:$0xff]
    %v131 = vld [vmem:[#allocation5 + $0x188] sm:$0xff]
    %v132 = vld [vmem:[#allocation5 + $0x190] sm:$0xff]
    %v133 = vld [vmem:[#allocation5 + $0x198] sm:$0xff]
    %v134 = vld [vmem:[#allocation5 + $0x1a0] sm:$0xff]
    %v135 = vld [vmem:[#allocation5 + $0x1a8] sm:$0xff]
    %v136 = vld [vmem:[#allocation5 + $0x1b0] sm:$0xff]
    %v137 = vld [vmem:[#allocation5 + $0x1b8] sm:$0xff]
    %v138 = vld [vmem:[#allocation5 + $0x1c0] sm:$0xff]
    %v139 = vld [vmem:[#allocation5 + $0x1c8] sm:$0xff]
    %v140 = vld [vmem:[#allocation5 + $0x1d0] sm:$0xff]
    %v141 = vld [vmem:[#allocation5 + $0x1d8] sm:$0xff]
    %v142 = vld [vmem:[#allocation5 + $0x1e0] sm:$0xff]
    %v143 = vld [vmem:[#allocation5 + $0x1e8] sm:$0xff]
    %v144 = vld [vmem:[#allocation5 + $0x1f0] sm:$0xff]
    %v145 = vld [vmem:[#allocation5 + $0x1f8] sm:$0xff]
    %v146 = vld [vmem:[#allocation5 + $0x200] sm:$0xff]
    %v147 = vld [vmem:[#allocation5 + $0x208] sm:$0xff]
    %v148 = vld [vmem:[#allocation5 + $0x210] sm:$0xff]
    %v149 = vld [vmem:[#allocation5 + $0x218] sm:$0xff]
    %v150 = vld [vmem:[#allocation5 + $0x220] sm:$0xff]
    %v151 = vld [vmem:[#allocation5 + $0x228] sm:$0xff]
    %v152 = vld [vmem:[#allocation5 + $0x230] sm:$0xff]
    %v153 = vld [vmem:[#allocation5 + $0x238] sm:$0xff]
    %v154 = vld [vmem:[#allocation5 + $0x240] sm:$0xff]
    %v155 = vld [vmem:[#allocation5 + $0x248] sm:$0xff]
    %v156 = vld [vmem:[#allocation5 + $0x250] sm:$0xff]
    %v157 = vld [vmem:[#allocation5 + $0x258] sm:$0xff]
    %v158 = vld [vmem:[#allocation5 + $0x260] sm:$0xff]
    %v159 = vld [vmem:[#allocation5 + $0x268] sm:$0xff]
    %v160 = vld [vmem:[#allocation5 + $0x270] sm:$0xff]
    %v161 = vld [vmem:[#allocation5 + $0x278] sm:$0xff]
    %v162 = vld [vmem:[#allocation5 + $0x280] sm:$0xff]
    %v163 = vld [vmem:[#allocation5 + $0x288] sm:$0xff]
    %v164 = vld [vmem:[#allocation5 + $0x290] sm:$0xff]
    %v165 = vld [vmem:[#allocation5 + $0x298] sm:$0xff]
    %v166 = vld [vmem:[#allocation5 + $0x2a0] sm:$0xff]
    %v167 = vld [vmem:[#allocation5 + $0x2a8] sm:$0xff]
    %v168 = vld [vmem:[#allocation5 + $0x2b0] sm:$0xff]
    %v169 = vld [vmem:[#allocation5 + $0x2b8] sm:$0xff]
    %v170 = vld [vmem:[#allocation5 + $0x2c0] sm:$0xff]
    %v171 = vld [vmem:[#allocation5 + $0x2c8] sm:$0xff]
    %v172 = vld [vmem:[#allocation5 + $0x2d0] sm:$0xff]
    %v173 = vld [vmem:[#allocation5 + $0x2d8] sm:$0xff]
    %v174 = vld [vmem:[#allocation5 + $0x2e0] sm:$0xff]
    %v175 = vld [vmem:[#allocation5 + $0x2e8] sm:$0xff]
    %v176 = vld [vmem:[#allocation5 + $0x2f0] sm:$0xff]
    %v177 = vld [vmem:[#allocation5 + $0x2f8] sm:$0xff]
    %v178 = vld [vmem:[#allocation5 + $0x300] sm:$0xff]
    %v179 = vld [vmem:[#allocation5 + $0x308] sm:$0xff]
    %v180 = vld [vmem:[#allocation5 + $0x310] sm:$0xff]
    %v181 = vld [vmem:[#allocation5 + $0x318] sm:$0xff]
    %v182 = vld [vmem:[#allocation5 + $0x320] sm:$0xff]
    %v183 = vld [vmem:[#allocation5 + $0x328] sm:$0xff]
    %v184 = vld [vmem:[#allocation5 + $0x330] sm:$0xff]
    %v185 = vld [vmem:[#allocation5 + $0x338] sm:$0xff]
    %v186 = vld [vmem:[#allocation5 + $0x340] sm:$0xff]
    %v187 = vld [vmem:[#allocation5 + $0x348] sm:$0xff]
    %v188 = vld [vmem:[#allocation5 + $0x350] sm:$0xff]
    %v189 = vld [vmem:[#allocation5 + $0x358] sm:$0xff]
    %v190 = vld [vmem:[#allocation5 + $0x360] sm:$0xff]
    %v191 = vld [vmem:[#allocation5 + $0x368] sm:$0xff]
    %v192 = vld [vmem:[#allocation5 + $0x370] sm:$0xff]
    %v193 = vld [vmem:[#allocation5 + $0x378] sm:$0xff]
    %v194 = vld [vmem:[#allocation5 + $0x380] sm:$0xff]
    %v195 = vld [vmem:[#allocation5 + $0x388] sm:$0xff]
    %v196 = vld [vmem:[#allocation5 + $0x390] sm:$0xff]
    %v197 = vld [vmem:[#allocation5 + $0x398] sm:$0xff]
    %v198 = vld [vmem:[#allocation5 + $0x3a0] sm:$0xff]
    %v199 = vld [vmem:[#allocation5 + $0x3a8] sm:$0xff]
    %v200 = vld [vmem:[#allocation5 + $0x3b0] sm:$0xff]
    %v201 = vld [vmem:[#allocation5 + $0x3b8] sm:$0xff]
    %v202 = vld [vmem:[#allocation5 + $0x3c0] sm:$0xff]
    %v203 = vld [vmem:[#allocation5 + $0x3c8] sm:$0xff]
    %v204 = vld [vmem:[#allocation5 + $0x3d0] sm:$0xff]
    %v205 = vld [vmem:[#allocation5 + $0x3d8] sm:$0xff]
    %v206 = vld [vmem:[#allocation5 + $0x3e0] sm:$0xff]
    %v207 = vld [vmem:[#allocation5 + $0x3e8] sm:$0xff]
    %v208 = vld [vmem:[#allocation5 + $0x3f0] sm:$0xff]
    %v209 = vld [vmem:[#allocation5 + $0x3f8] sm:$0xff]
    %v210 = vld [vmem:[%s2] sm:$0xf]
    %v212 = vlaneseq
    %v213 = vshrl.u32 %v212, 7
    %v214 = vsub.s32 0, %v213
    %v215 = vrot.slane %v210, %v214
    %v216 = vlaneseq
    %v217 = vshrl.u32 %v216, 7
    %v218 = vsub.s32 1, %v217
    %v219 = vrot.slane %v210, %v218
    %v220 = vlaneseq
    %v221 = vshrl.u32 %v220, 7
    %v222 = vsub.s32 2, %v221
    %v223 = vrot.slane %v210, %v222
    %v224 = vlaneseq
    %v225 = vshrl.u32 %v224, 7
    %v226 = vsub.s32 3, %v225
    %v227 = vrot.slane %v210, %v226
    %v234 = vunpack.c.l.b16 %v80
    %v235 = vunpack.c.h.b16 %v80
    %v236 = vunpack.c.l.b16 %v81
    %v237 = vunpack.c.h.b16 %v81
    %v238 = vpack.c.b16 %v234, %v234
    %v239 = vpack.c.b16 %v235, %v235
    %v240 = vpack.c.b16 %v236, %v236
    %v241 = vpack.c.b16 %v237, %v237
    %v374 = vunpack.c.l.b16 %v82
    %v375 = vunpack.c.h.b16 %v82
    %v376 = vunpack.c.l.b16 %v83
    %v377 = vunpack.c.h.b16 %v83
    %v378 = vunpack.c.l.b16 %v84
    %v379 = vunpack.c.h.b16 %v84
    %v380 = vunpack.c.l.b16 %v85
    %v381 = vunpack.c.h.b16 %v85
    %v382 = vunpack.c.l.b16 %v86
    %v383 = vunpack.c.h.b16 %v86
    %v384 = vunpack.c.l.b16 %v87
    %v385 = vunpack.c.h.b16 %v87
    %v386 = vunpack.c.l.b16 %v88
    %v387 = vunpack.c.h.b16 %v88
    %v388 = vunpack.c.l.b16 %v89
    %v389 = vunpack.c.h.b16 %v89
    %v390 = vunpack.c.l.b16 %v90
    %v391 = vunpack.c.h.b16 %v90
    %v392 = vunpack.c.l.b16 %v91
    %v393 = vunpack.c.h.b16 %v91
    %v394 = vunpack.c.l.b16 %v92
    %v395 = vunpack.c.h.b16 %v92
    %v396 = vunpack.c.l.b16 %v93
    %v397 = vunpack.c.h.b16 %v93
    %v398 = vunpack.c.l.b16 %v94
    %v399 = vunpack.c.h.b16 %v94
    %v400 = vunpack.c.l.b16 %v95
    %v401 = vunpack.c.h.b16 %v95
    %v402 = vunpack.c.l.b16 %v96
    %v403 = vunpack.c.h.b16 %v96
    %v404 = vunpack.c.l.b16 %v97
    %v405 = vunpack.c.h.b16 %v97
    %v406 = vunpack.c.l.b16 %v98
    %v407 = vunpack.c.h.b16 %v98
    %v408 = vunpack.c.l.b16 %v99
    %v409 = vunpack.c.h.b16 %v99
    %v410 = vunpack.c.l.b16 %v100
    %v411 = vunpack.c.h.b16 %v100
    %v412 = vunpack.c.l.b16 %v101
    %v413 = vunpack.c.h.b16 %v101
    %v414 = vunpack.c.l.b16 %v102
    %v415 = vunpack.c.h.b16 %v102
    %v416 = vunpack.c.l.b16 %v103
    %v417 = vunpack.c.h.b16 %v103
    %v418 = vunpack.c.l.b16 %v104
    %v419 = vunpack.c.h.b16 %v104
    %v420 = vunpack.c.l.b16 %v105
    %v421 = vunpack.c.h.b16 %v105
    %v422 = vunpack.c.l.b16 %v106
    %v423 = vunpack.c.h.b16 %v106
    %v424 = vunpack.c.l.b16 %v107
    %v425 = vunpack.c.h.b16 %v107
    %v426 = vunpack.c.l.b16 %v108
    %v427 = vunpack.c.h.b16 %v108
    %v428 = vunpack.c.l.b16 %v109
    %v429 = vunpack.c.h.b16 %v109
    %v430 = vunpack.c.l.b16 %v110
    %v431 = vunpack.c.h.b16 %v110
    %v432 = vunpack.c.l.b16 %v111
    %v433 = vunpack.c.h.b16 %v111
    %v434 = vunpack.c.l.b16 %v112
    %v435 = vunpack.c.h.b16 %v112
    %v436 = vunpack.c.l.b16 %v113
    %v437 = vunpack.c.h.b16 %v113
    %v438 = vunpack.c.l.b16 %v114
    %v439 = vunpack.c.h.b16 %v114
    %v440 = vunpack.c.l.b16 %v115
    %v441 = vunpack.c.h.b16 %v115
    %v442 = vunpack.c.l.b16 %v116
    %v443 = vunpack.c.h.b16 %v116
    %v444 = vunpack.c.l.b16 %v117
    %v445 = vunpack.c.h.b16 %v117
    %v446 = vunpack.c.l.b16 %v118
    %v447 = vunpack.c.h.b16 %v118
    %v448 = vunpack.c.l.b16 %v119
    %v449 = vunpack.c.h.b16 %v119
    %v450 = vunpack.c.l.b16 %v120
    %v451 = vunpack.c.h.b16 %v120
    %v452 = vunpack.c.l.b16 %v121
    %v453 = vunpack.c.h.b16 %v121
    %v454 = vunpack.c.l.b16 %v122
    %v455 = vunpack.c.h.b16 %v122
    %v456 = vunpack.c.l.b16 %v123
    %v457 = vunpack.c.h.b16 %v123
    %v458 = vunpack.c.l.b16 %v124
    %v459 = vunpack.c.h.b16 %v124
    %v460 = vunpack.c.l.b16 %v125
    %v461 = vunpack.c.h.b16 %v125
    %v462 = vunpack.c.l.b16 %v126
    %v463 = vunpack.c.h.b16 %v126
    %v464 = vunpack.c.l.b16 %v127
    %v465 = vunpack.c.h.b16 %v127
    %v466 = vunpack.c.l.b16 %v128
    %v467 = vunpack.c.h.b16 %v128
    %v468 = vunpack.c.l.b16 %v129
    %v469 = vunpack.c.h.b16 %v129
    %v470 = vunpack.c.l.b16 %v130
    %v471 = vunpack.c.h.b16 %v130
    %v472 = vunpack.c.l.b16 %v131
    %v473 = vunpack.c.h.b16 %v131
    %v474 = vunpack.c.l.b16 %v132
    %v475 = vunpack.c.h.b16 %v132
    %v476 = vunpack.c.l.b16 %v133
    %v477 = vunpack.c.h.b16 %v133
    %v478 = vunpack.c.l.b16 %v134
    %v479 = vunpack.c.h.b16 %v134
    %v480 = vunpack.c.l.b16 %v135
    %v481 = vunpack.c.h.b16 %v135
    %v482 = vunpack.c.l.b16 %v136
    %v483 = vunpack.c.h.b16 %v136
    %v484 = vunpack.c.l.b16 %v137
    %v485 = vunpack.c.h.b16 %v137
    %v486 = vunpack.c.l.b16 %v138
    %v487 = vunpack.c.h.b16 %v138
    %v488 = vunpack.c.l.b16 %v139
    %v489 = vunpack.c.h.b16 %v139
    %v490 = vunpack.c.l.b16 %v140
    %v491 = vunpack.c.h.b16 %v140
    %v492 = vunpack.c.l.b16 %v141
    %v493 = vunpack.c.h.b16 %v141
    %v494 = vunpack.c.l.b16 %v142
    %v495 = vunpack.c.h.b16 %v142
    %v496 = vunpack.c.l.b16 %v143
    %v497 = vunpack.c.h.b16 %v143
    %v498 = vunpack.c.l.b16 %v144
    %v499 = vunpack.c.h.b16 %v144
    %v500 = vunpack.c.l.b16 %v145
    %v501 = vunpack.c.h.b16 %v145
    %v502 = vunpack.c.l.b16 %v146
    %v503 = vunpack.c.h.b16 %v146
    %v504 = vunpack.c.l.b16 %v147
    %v505 = vunpack.c.h.b16 %v147
    %v506 = vunpack.c.l.b16 %v148
    %v507 = vunpack.c.h.b16 %v148
    %v508 = vunpack.c.l.b16 %v149
    %v509 = vunpack.c.h.b16 %v149
    %v510 = vunpack.c.l.b16 %v150
    %v511 = vunpack.c.h.b16 %v150
    %v512 = vunpack.c.l.b16 %v151
    %v513 = vunpack.c.h.b16 %v151
    %v514 = vunpack.c.l.b16 %v152
    %v515 = vunpack.c.h.b16 %v152
    %v516 = vunpack.c.l.b16 %v153
    %v517 = vunpack.c.h.b16 %v153
    %v518 = vunpack.c.l.b16 %v154
    %v519 = vunpack.c.h.b16 %v154
    %v520 = vunpack.c.l.b16 %v155
    %v521 = vunpack.c.h.b16 %v155
    %v522 = vunpack.c.l.b16 %v156
    %v523 = vunpack.c.h.b16 %v156
    %v524 = vunpack.c.l.b16 %v157
    %v525 = vunpack.c.h.b16 %v157
    %v526 = vunpack.c.l.b16 %v158
    %v527 = vunpack.c.h.b16 %v158
    %v528 = vunpack.c.l.b16 %v159
    %v529 = vunpack.c.h.b16 %v159
    %v530 = vunpack.c.l.b16 %v160
    %v531 = vunpack.c.h.b16 %v160
    %v532 = vunpack.c.l.b16 %v161
    %v533 = vunpack.c.h.b16 %v161
    %v534 = vunpack.c.l.b16 %v162
    %v535 = vunpack.c.h.b16 %v162
    %v536 = vunpack.c.l.b16 %v163
    %v537 = vunpack.c.h.b16 %v163
    %v538 = vunpack.c.l.b16 %v164
    %v539 = vunpack.c.h.b16 %v164
    %v540 = vunpack.c.l.b16 %v165
    %v541 = vunpack.c.h.b16 %v165
    %v542 = vunpack.c.l.b16 %v166
    %v543 = vunpack.c.h.b16 %v166
    %v544 = vunpack.c.l.b16 %v167
    %v545 = vunpack.c.h.b16 %v167
    %v546 = vunpack.c.l.b16 %v168
    %v547 = vunpack.c.h.b16 %v168
    %v548 = vunpack.c.l.b16 %v169
    %v549 = vunpack.c.h.b16 %v169
    %v550 = vunpack.c.l.b16 %v170
    %v551 = vunpack.c.h.b16 %v170
    %v552 = vunpack.c.l.b16 %v171
    %v553 = vunpack.c.h.b16 %v171
    %v554 = vunpack.c.l.b16 %v172
    %v555 = vunpack.c.h.b16 %v172
    %v556 = vunpack.c.l.b16 %v173
    %v557 = vunpack.c.h.b16 %v173
    %v558 = vunpack.c.l.b16 %v174
    %v559 = vunpack.c.h.b16 %v174
    %v560 = vunpack.c.l.b16 %v175
    %v561 = vunpack.c.h.b16 %v175
    %v562 = vunpack.c.l.b16 %v176
    %v563 = vunpack.c.h.b16 %v176
    %v564 = vunpack.c.l.b16 %v177
    %v565 = vunpack.c.h.b16 %v177
    %v566 = vunpack.c.l.b16 %v178
    %v567 = vunpack.c.h.b16 %v178
    %v568 = vunpack.c.l.b16 %v179
    %v569 = vunpack.c.h.b16 %v179
    %v570 = vunpack.c.l.b16 %v180
    %v571 = vunpack.c.h.b16 %v180
    %v572 = vunpack.c.l.b16 %v181
    %v573 = vunpack.c.h.b16 %v181
    %v574 = vunpack.c.l.b16 %v182
    %v575 = vunpack.c.h.b16 %v182
    %v576 = vunpack.c.l.b16 %v183
    %v577 = vunpack.c.h.b16 %v183
    %v578 = vunpack.c.l.b16 %v184
    %v579 = vunpack.c.h.b16 %v184
    %v580 = vunpack.c.l.b16 %v185
    %v581 = vunpack.c.h.b16 %v185
    %v582 = vunpack.c.l.b16 %v186
    %v583 = vunpack.c.h.b16 %v186
    %v584 = vunpack.c.l.b16 %v187
    %v585 = vunpack.c.h.b16 %v187
    %v586 = vunpack.c.l.b16 %v188
    %v587 = vunpack.c.h.b16 %v188
    %v588 = vunpack.c.l.b16 %v189
    %v589 = vunpack.c.h.b16 %v189
    %v590 = vunpack.c.l.b16 %v190
    %v591 = vunpack.c.h.b16 %v190
    %v592 = vunpack.c.l.b16 %v191
    %v593 = vunpack.c.h.b16 %v191
    %v594 = vunpack.c.l.b16 %v192
    %v595 = vunpack.c.h.b16 %v192
    %v596 = vunpack.c.l.b16 %v193
    %v597 = vunpack.c.h.b16 %v193
    %v598 = vunpack.c.l.b16 %v194
    %v599 = vunpack.c.h.b16 %v194
    %v600 = vunpack.c.l.b16 %v195
    %v601 = vunpack.c.h.b16 %v195
    %v602 = vunpack.c.l.b16 %v196
    %v603 = vunpack.c.h.b16 %v196
    %v604 = vunpack.c.l.b16 %v197
    %v605 = vunpack.c.h.b16 %v197
    %v606 = vunpack.c.l.b16 %v198
    %v607 = vunpack.c.h.b16 %v198
    %v608 = vunpack.c.l.b16 %v199
    %v609 = vunpack.c.h.b16 %v199
    %v610 = vunpack.c.l.b16 %v200
    %v611 = vunpack.c.h.b16 %v200
    %v612 = vunpack.c.l.b16 %v201
    %v613 = vunpack.c.h.b16 %v201
    %v614 = vunpack.c.l.b16 %v202
    %v615 = vunpack.c.h.b16 %v202
    %v616 = vunpack.c.l.b16 %v203
    %v617 = vunpack.c.h.b16 %v203
    %v618 = vunpack.c.l.b16 %v204
    %v619 = vunpack.c.h.b16 %v204
    %v620 = vunpack.c.l.b16 %v205
    %v621 = vunpack.c.h.b16 %v205
    %v622 = vunpack.c.l.b16 %v206
    %v623 = vunpack.c.h.b16 %v206
    %v624 = vunpack.c.l.b16 %v207
    %v625 = vunpack.c.h.b16 %v207
    %v626 = vunpack.c.l.b16 %v208
    %v627 = vunpack.c.h.b16 %v208
    %v628 = vunpack.c.l.b16 %v209
    %v629 = vunpack.c.h.b16 %v209
    %v630 = vpack.c.b16 %v378, %v374
    %v631 = vpack.c.b16 %v379, %v375
    %v632 = vpack.c.b16 %v380, %v376
    %v633 = vpack.c.b16 %v381, %v377
    %v634 = vpack.c.b16 %v386, %v382
    %v635 = vpack.c.b16 %v387, %v383
    %v636 = vpack.c.b16 %v388, %v384
    %v637 = vpack.c.b16 %v389, %v385
    %v638 = vpack.c.b16 %v394, %v390
    %v639 = vpack.c.b16 %v395, %v391
    %v640 = vpack.c.b16 %v396, %v392
    %v641 = vpack.c.b16 %v397, %v393
    %v642 = vpack.c.b16 %v402, %v398
    %v643 = vpack.c.b16 %v403, %v399
    %v644 = vpack.c.b16 %v404, %v400
    %v645 = vpack.c.b16 %v405, %v401
    %v646 = vpack.c.b16 %v410, %v406
    %v647 = vpack.c.b16 %v411, %v407
    %v648 = vpack.c.b16 %v412, %v408
    %v649 = vpack.c.b16 %v413, %v409
    %v650 = vpack.c.b16 %v418, %v414
    %v651 = vpack.c.b16 %v419, %v415
    %v652 = vpack.c.b16 %v420, %v416
    %v653 = vpack.c.b16 %v421, %v417
    %v654 = vpack.c.b16 %v426, %v422
    %v655 = vpack.c.b16 %v427, %v423
    %v656 = vpack.c.b16 %v428, %v424
    %v657 = vpack.c.b16 %v429, %v425
    %v658 = vpack.c.b16 %v434, %v430
    %v659 = vpack.c.b16 %v435, %v431
    %v660 = vpack.c.b16 %v436, %v432
    %v661 = vpack.c.b16 %v437, %v433
    %v662 = vpack.c.b16 %v442, %v438
    %v663 = vpack.c.b16 %v443, %v439
    %v664 = vpack.c.b16 %v444, %v440
    %v665 = vpack.c.b16 %v445, %v441
    %v666 = vpack.c.b16 %v450, %v446
    %v667 = vpack.c.b16 %v451, %v447
    %v668 = vpack.c.b16 %v452, %v448
    %v669 = vpack.c.b16 %v453, %v449
    %v670 = vpack.c.b16 %v458, %v454
    %v671 = vpack.c.b16 %v459, %v455
    %v672 = vpack.c.b16 %v460, %v456
    %v673 = vpack.c.b16 %v461, %v457
    %v674 = vpack.c.b16 %v466, %v462
    %v675 = vpack.c.b16 %v467, %v463
    %v676 = vpack.c.b16 %v468, %v464
    %v677 = vpack.c.b16 %v469, %v465
    %v678 = vpack.c.b16 %v474, %v470
    %v679 = vpack.c.b16 %v475, %v471
    %v680 = vpack.c.b16 %v476, %v472
    %v681 = vpack.c.b16 %v477, %v473
    %v682 = vpack.c.b16 %v482, %v478
    %v683 = vpack.c.b16 %v483, %v479
    %v684 = vpack.c.b16 %v484, %v480
    %v685 = vpack.c.b16 %v485, %v481
    %v686 = vpack.c.b16 %v490, %v486
    %v687 = vpack.c.b16 %v491, %v487
    %v688 = vpack.c.b16 %v492, %v488
    %v689 = vpack.c.b16 %v493, %v489
    %v690 = vpack.c.b16 %v498, %v494
    %v691 = vpack.c.b16 %v499, %v495
    %v692 = vpack.c.b16 %v500, %v496
    %v693 = vpack.c.b16 %v501, %v497
    %v694 = vpack.c.b16 %v506, %v502
    %v695 = vpack.c.b16 %v507, %v503
    %v696 = vpack.c.b16 %v508, %v504
    %v697 = vpack.c.b16 %v509, %v505
    %v698 = vpack.c.b16 %v514, %v510
    %v699 = vpack.c.b16 %v515, %v511
    %v700 = vpack.c.b16 %v516, %v512
    %v701 = vpack.c.b16 %v517, %v513
    %v702 = vpack.c.b16 %v522, %v518
    %v703 = vpack.c.b16 %v523, %v519
    %v704 = vpack.c.b16 %v524, %v520
    %v705 = vpack.c.b16 %v525, %v521
    %v706 = vpack.c.b16 %v530, %v526
    %v707 = vpack.c.b16 %v531, %v527
    %v708 = vpack.c.b16 %v532, %v528
    %v709 = vpack.c.b16 %v533, %v529
    %v710 = vpack.c.b16 %v538, %v534
    %v711 = vpack.c.b16 %v539, %v535
    %v712 = vpack.c.b16 %v540, %v536
    %v713 = vpack.c.b16 %v541, %v537
    %v714 = vpack.c.b16 %v546, %v542
    %v715 = vpack.c.b16 %v547, %v543
    %v716 = vpack.c.b16 %v548, %v544
    %v717 = vpack.c.b16 %v549, %v545
    %v718 = vpack.c.b16 %v554, %v550
    %v719 = vpack.c.b16 %v555, %v551
    %v720 = vpack.c.b16 %v556, %v552
    %v721 = vpack.c.b16 %v557, %v553
    %v722 = vpack.c.b16 %v562, %v558
    %v723 = vpack.c.b16 %v563, %v559
    %v724 = vpack.c.b16 %v564, %v560
    %v725 = vpack.c.b16 %v565, %v561
    %v726 = vpack.c.b16 %v570, %v566
    %v727 = vpack.c.b16 %v571, %v567
    %v728 = vpack.c.b16 %v572, %v568
    %v729 = vpack.c.b16 %v573, %v569
    %v730 = vpack.c.b16 %v578, %v574
    %v731 = vpack.c.b16 %v579, %v575
    %v732 = vpack.c.b16 %v580, %v576
    %v733 = vpack.c.b16 %v581, %v577
    %v734 = vpack.c.b16 %v586, %v582
    %v735 = vpack.c.b16 %v587, %v583
    %v736 = vpack.c.b16 %v588, %v584
    %v737 = vpack.c.b16 %v589, %v585
    %v738 = vpack.c.b16 %v594, %v590
    %v739 = vpack.c.b16 %v595, %v591
    %v740 = vpack.c.b16 %v596, %v592
    %v741 = vpack.c.b16 %v597, %v593
    %v742 = vpack.c.b16 %v602, %v598
    %v743 = vpack.c.b16 %v603, %v599
    %v744 = vpack.c.b16 %v604, %v600
    %v745 = vpack.c.b16 %v605, %v601
    %v746 = vpack.c.b16 %v610, %v606
    %v747 = vpack.c.b16 %v611, %v607
    %v748 = vpack.c.b16 %v612, %v608
    %v749 = vpack.c.b16 %v613, %v609
    %v750 = vpack.c.b16 %v618, %v614
    %v751 = vpack.c.b16 %v619, %v615
    %v752 = vpack.c.b16 %v620, %v616
    %v753 = vpack.c.b16 %v621, %v617
    %v754 = vpack.c.b16 %v626, %v622
    %v755 = vpack.c.b16 %v627, %v623
    %v756 = vpack.c.b16 %v628, %v624
    %v757 = vpack.c.b16 %v629, %v625
    %886 = vmatprep.subr.bf16.mxu0 %v631
    %887 = vmatpush1.bf16.msra.mxu0 %v630
    %888 = vmatprep.subr.bf16.mxu0 %v635
    %889 = vmatpush1.bf16.msra.mxu0 %v634
    %890 = vmatprep.subr.bf16.mxu0 %v639
    %891 = vmatpush1.bf16.msra.mxu0 %v638
    %892 = vmatprep.subr.bf16.mxu0 %v643
    %893 = vmatpush1.bf16.msra.mxu0 %v642
    %894 = vmatprep.subr.bf16.mxu0 %v647
    %895 = vmatpush1.bf16.msra.mxu0 %v646
    %896 = vmatprep.subr.bf16.mxu0 %v651
    %897 = vmatpush1.bf16.msra.mxu0 %v650
    %898 = vmatprep.subr.bf16.mxu0 %v655
    %899 = vmatpush1.bf16.msra.mxu0 %v654
    %900 = vmatprep.subr.bf16.mxu0 %v659
    %901 = vmatpush1.bf16.msra.mxu0 %v658
    %902 = vmatprep.subr.bf16.mxu0 %v663
    %903 = vmatpush1.bf16.msra.mxu0 %v662
    %904 = vmatprep.subr.bf16.mxu0 %v667
    %905 = vmatpush1.bf16.msra.mxu0 %v666
    %906 = vmatprep.subr.bf16.mxu0 %v671
    %907 = vmatpush1.bf16.msra.mxu0 %v670
    %908 = vmatprep.subr.bf16.mxu0 %v675
    %909 = vmatpush1.bf16.msra.mxu0 %v674
    %910 = vmatprep.subr.bf16.mxu0 %v679
    %911 = vmatpush1.bf16.msra.mxu0 %v678
    %912 = vmatprep.subr.bf16.mxu0 %v683
    %913 = vmatpush1.bf16.msra.mxu0 %v682
    %914 = vmatprep.subr.bf16.mxu0 %v687
    %915 = vmatpush1.bf16.msra.mxu0 %v686
    %916 = vmatprep.subr.bf16.mxu0 %v691
    %917 = vmatpush1.bf16.msra.mxu0 %v690
    %918 = vmatprep.mubr.bf16.mxu0 %v239
    %919 = vmatmul.mubr.bf16.gmra.mrb[0].mxu0 %v238
    %v920 = vpop.f32.mrb[0].mxu0
    %v921 = vadd.f32 %v215, %v920
    %v922 = vpop.f32.mrb[0].mxu0
    %v923 = vadd.f32 %v219, %v922
    %v924 = vpop.f32.mrb[0].mxu0
    %v925 = vpop.f32.mrb[0].mxu0
    %926 = vdwg.mxu0
    %927 = vmatprep.subr.bf16.mxu0 %v695
    %928 = vmatpush1.bf16.msra.mxu0 %v694
    %929 = vmatprep.subr.bf16.mxu0 %v699
    %930 = vmatpush1.bf16.msra.mxu0 %v698
    %931 = vmatprep.subr.bf16.mxu0 %v703
    %932 = vmatpush1.bf16.msra.mxu0 %v702
    %933 = vmatprep.subr.bf16.mxu0 %v707
    %934 = vmatpush1.bf16.msra.mxu0 %v706
    %935 = vmatprep.subr.bf16.mxu0 %v711
    %936 = vmatpush1.bf16.msra.mxu0 %v710
    %937 = vmatprep.subr.bf16.mxu0 %v715
    %938 = vmatpush1.bf16.msra.mxu0 %v714
    %939 = vmatprep.subr.bf16.mxu0 %v719
    %940 = vmatpush1.bf16.msra.mxu0 %v718
    %941 = vmatprep.subr.bf16.mxu0 %v723
    %942 = vmatpush1.bf16.msra.mxu0 %v722
    %943 = vmatprep.subr.bf16.mxu0 %v727
    %944 = vmatpush1.bf16.msra.mxu0 %v726
    %945 = vmatprep.subr.bf16.mxu0 %v731
    %946 = vmatpush1.bf16.msra.mxu0 %v730
    %947 = vmatprep.subr.bf16.mxu0 %v735
    %948 = vmatpush1.bf16.msra.mxu0 %v734
    %949 = vmatprep.subr.bf16.mxu0 %v739
    %950 = vmatpush1.bf16.msra.mxu0 %v738
    %951 = vmatprep.subr.bf16.mxu0 %v743
    %952 = vmatpush1.bf16.msra.mxu0 %v742
    %953 = vmatprep.subr.bf16.mxu0 %v747
    %954 = vmatpush1.bf16.msra.mxu0 %v746
    %955 = vmatprep.subr.bf16.mxu0 %v751
    %956 = vmatpush1.bf16.msra.mxu0 %v750
    %957 = vmatprep.subr.bf16.mxu0 %v755
    %958 = vmatpush1.bf16.msra.mxu0 %v754
    %959 = vmatprep.mubr.bf16.mxu0 %v241
    %960 = vmatmul.mubr.bf16.gmra.mrb[0].mxu0 %v240
    %v961 = vpop.f32.mrb[0].mxu0
    %v962 = vadd.f32 %v921, %v961
    %v963 = vpop.f32.mrb[0].mxu0
    %v964 = vadd.f32 %v923, %v963
    %v965 = vpop.f32.mrb[0].mxu0
    %v966 = vpop.f32.mrb[0].mxu0
    %967 = vdwg.mxu0
    %968 = vmatprep.subr.bf16.mxu0 %v633
    %969 = vmatpush1.bf16.msra.mxu0 %v632
    %970 = vmatprep.subr.bf16.mxu0 %v637
    %971 = vmatpush1.bf16.msra.mxu0 %v636
    %972 = vmatprep.subr.bf16.mxu0 %v641
    %973 = vmatpush1.bf16.msra.mxu0 %v640
    %974 = vmatprep.subr.bf16.mxu0 %v645
    %975 = vmatpush1.bf16.msra.mxu0 %v644
    %976 = vmatprep.subr.bf16.mxu0 %v649
    %977 = vmatpush1.bf16.msra.mxu0 %v648
    %978 = vmatprep.subr.bf16.mxu0 %v653
    %979 = vmatpush1.bf16.msra.mxu0 %v652
    %980 = vmatprep.subr.bf16.mxu0 %v657
    %981 = vmatpush1.bf16.msra.mxu0 %v656
    %982 = vmatprep.subr.bf16.mxu0 %v661
    %983 = vmatpush1.bf16.msra.mxu0 %v660
    %984 = vmatprep.subr.bf16.mxu0 %v665
    %985 = vmatpush1.bf16.msra.mxu0 %v664
    %986 = vmatprep.subr.bf16.mxu0 %v669
    %987 = vmatpush1.bf16.msra.mxu0 %v668
    %988 = vmatprep.subr.bf16.mxu0 %v673
    %989 = vmatpush1.bf16.msra.mxu0 %v672
    %990 = vmatprep.subr.bf16.mxu0 %v677
    %991 = vmatpush1.bf16.msra.mxu0 %v676
    %992 = vmatprep.subr.bf16.mxu0 %v681
    %993 = vmatpush1.bf16.msra.mxu0 %v680
    %994 = vmatprep.subr.bf16.mxu0 %v685
    %995 = vmatpush1.bf16.msra.mxu0 %v684
    %996 = vmatprep.subr.bf16.mxu0 %v689
    %997 = vmatpush1.bf16.msra.mxu0 %v688
    %998 = vmatprep.subr.bf16.mxu0 %v693
    %999 = vmatpush1.bf16.msra.mxu0 %v692
    %1000 = vmatprep.mubr.bf16.mxu0 %v239
    %1001 = vmatmul.mubr.bf16.gmra.mrb[0].mxu0 %v238
    %v1002 = vpop.f32.mrb[0].mxu0
    %v1003 = vadd.f32 %v223, %v1002
    %v1004 = vpop.f32.mrb[0].mxu0
    %v1005 = vadd.f32 %v227, %v1004
    %v1006 = vpop.f32.mrb[0].mxu0
    %v1007 = vpop.f32.mrb[0].mxu0
    %1008 = vdwg.mxu0
    %1009 = vmatprep.subr.bf16.mxu0 %v697
    %1010 = vmatpush1.bf16.msra.mxu0 %v696
    %1011 = vmatprep.subr.bf16.mxu0 %v701
    %1012 = vmatpush1.bf16.msra.mxu0 %v700
    %1013 = vmatprep.subr.bf16.mxu0 %v705
    %1014 = vmatpush1.bf16.msra.mxu0 %v704
    %1015 = vmatprep.subr.bf16.mxu0 %v709
    %1016 = vmatpush1.bf16.msra.mxu0 %v708
    %1017 = vmatprep.subr.bf16.mxu0 %v713
    %1018 = vmatpush1.bf16.msra.mxu0 %v712
    %1019 = vmatprep.subr.bf16.mxu0 %v717
    %1020 = vmatpush1.bf16.msra.mxu0 %v716
    %1021 = vmatprep.subr.bf16.mxu0 %v721
    %1022 = vmatpush1.bf16.msra.mxu0 %v720
    %1023 = vmatprep.subr.bf16.mxu0 %v725
    %1024 = vmatpush1.bf16.msra.mxu0 %v724
    %1025 = vmatprep.subr.bf16.mxu0 %v729
    %1026 = vmatpush1.bf16.msra.mxu0 %v728
    %1027 = vmatprep.subr.bf16.mxu0 %v733
    %1028 = vmatpush1.bf16.msra.mxu0 %v732
    %1029 = vmatprep.subr.bf16.mxu0 %v737
    %1030 = vmatpush1.bf16.msra.mxu0 %v736
    %1031 = vmatprep.subr.bf16.mxu0 %v741
    %1032 = vmatpush1.bf16.msra.mxu0 %v740
    %1033 = vmatprep.subr.bf16.mxu0 %v745
    %1034 = vmatpush1.bf16.msra.mxu0 %v744
    %1035 = vmatprep.subr.bf16.mxu0 %v749
    %1036 = vmatpush1.bf16.msra.mxu0 %v748
    %1037 = vmatprep.subr.bf16.mxu0 %v753
    %1038 = vmatpush1.bf16.msra.mxu0 %v752
    %1039 = vmatprep.subr.bf16.mxu0 %v757
    %1040 = vmatpush1.bf16.msra.mxu0 %v756
    %1041 = vmatprep.mubr.bf16.mxu0 %v241
    %1042 = vmatmul.mubr.bf16.gmra.mrb[0].mxu0 %v240
    %v1043 = vpop.f32.mrb[0].mxu0
    %v1044 = vadd.f32 %v1003, %v1043
    %v1045 = vpop.f32.mrb[0].mxu0
    %v1046 = vadd.f32 %v1005, %v1045
    %v1047 = vpop.f32.mrb[0].mxu0
    %v1048 = vpop.f32.mrb[0].mxu0
    %1049 = vdwg.mxu0
    %v1050 = vmax.f32 %v962, 0.0
    %v1051 = vmax.f32 %v964, 0.0
    %v1052 = vmax.f32 %v1044, 0.0
    %v1053 = vmax.f32 %v1046, 0.0
    %v1054 = vpack.c.bf16 %v1050, %v1050
    %v1055 = vpack.c.bf16 %v1051, %v1051
    %v1056 = vpack.c.bf16 %v1052, %v1052
    %v1057 = vpack.c.bf16 %v1053, %v1053
    %v1058 = vld [vmem:[#allocation7] sm:$0xff]
    %v1059 = vld [vmem:[#allocation7 + $0x8] sm:$0xff]
    %v1060 = vld [vmem:[#allocation7 + $0x10] sm:$0xff]
    %v1061 = vld [vmem:[#allocation7 + $0x18] sm:$0xff]
    %v1062 = vld [vmem:[#allocation7 + $0x20] sm:$0xff]
    %v1063 = vld [vmem:[#allocation7 + $0x28] sm:$0xff]
    %v1064 = vld [vmem:[#allocation7 + $0x30] sm:$0xff]
    %v1065 = vld [vmem:[#allocation7 + $0x38] sm:$0xff]
    %v1066 = vld [vmem:[#allocation7 + $0x40] sm:$0xff]
    %v1067 = vld [vmem:[#allocation7 + $0x48] sm:$0xff]
    %v1068 = vld [vmem:[#allocation7 + $0x50] sm:$0xff]
    %v1069 = vld [vmem:[#allocation7 + $0x58] sm:$0xff]
    %v1070 = vld [vmem:[#allocation7 + $0x60] sm:$0xff]
    %v1071 = vld [vmem:[#allocation7 + $0x68] sm:$0xff]
    %v1072 = vld [vmem:[#allocation7 + $0x70] sm:$0xff]
    %v1073 = vld [vmem:[#allocation7 + $0x78] sm:$0xff]
    %v1074 = vld [vmem:[#allocation7 + $0x80] sm:$0xff]
    %v1075 = vld [vmem:[#allocation7 + $0x88] sm:$0xff]
    %v1076 = vld [vmem:[#allocation7 + $0x90] sm:$0xff]
    %v1077 = vld [vmem:[#allocation7 + $0x98] sm:$0xff]
    %v1078 = vld [vmem:[#allocation7 + $0xa0] sm:$0xff]
    %v1079 = vld [vmem:[#allocation7 + $0xa8] sm:$0xff]
    %v1080 = vld [vmem:[#allocation7 + $0xb0] sm:$0xff]
    %v1081 = vld [vmem:[#allocation7 + $0xb8] sm:$0xff]
    %v1082 = vld [vmem:[#allocation7 + $0xc0] sm:$0xff]
    %v1083 = vld [vmem:[#allocation7 + $0xc8] sm:$0xff]
    %v1084 = vld [vmem:[#allocation7 + $0xd0] sm:$0xff]
    %v1085 = vld [vmem:[#allocation7 + $0xd8] sm:$0xff]
    %v1086 = vld [vmem:[#allocation7 + $0xe0] sm:$0xff]
    %v1087 = vld [vmem:[#allocation7 + $0xe8] sm:$0xff]
    %v1088 = vld [vmem:[#allocation7 + $0xf0] sm:$0xff]
    %v1089 = vld [vmem:[#allocation7 + $0xf8] sm:$0xff]
    %v1090 = vld [vmem:[#allocation7 + $0x100] sm:$0xff]
    %v1091 = vld [vmem:[#allocation7 + $0x108] sm:$0xff]
    %v1092 = vld [vmem:[#allocation7 + $0x110] sm:$0xff]
    %v1093 = vld [vmem:[#allocation7 + $0x118] sm:$0xff]
    %v1094 = vld [vmem:[#allocation7 + $0x120] sm:$0xff]
    %v1095 = vld [vmem:[#allocation7 + $0x128] sm:$0xff]
    %v1096 = vld [vmem:[#allocation7 + $0x130] sm:$0xff]
    %v1097 = vld [vmem:[#allocation7 + $0x138] sm:$0xff]
    %v1098 = vld [vmem:[#allocation7 + $0x140] sm:$0xff]
    %v1099 = vld [vmem:[#allocation7 + $0x148] sm:$0xff]
    %v1100 = vld [vmem:[#allocation7 + $0x150] sm:$0xff]
    %v1101 = vld [vmem:[#allocation7 + $0x158] sm:$0xff]
    %v1102 = vld [vmem:[#allocation7 + $0x160] sm:$0xff]
    %v1103 = vld [vmem:[#allocation7 + $0x168] sm:$0xff]
    %v1104 = vld [vmem:[#allocation7 + $0x170] sm:$0xff]
    %v1105 = vld [vmem:[#allocation7 + $0x178] sm:$0xff]
    %v1106 = vld [vmem:[#allocation7 + $0x180] sm:$0xff]
    %v1107 = vld [vmem:[#allocation7 + $0x188] sm:$0xff]
    %v1108 = vld [vmem:[#allocation7 + $0x190] sm:$0xff]
    %v1109 = vld [vmem:[#allocation7 + $0x198] sm:$0xff]
    %v1110 = vld [vmem:[#allocation7 + $0x1a0] sm:$0xff]
    %v1111 = vld [vmem:[#allocation7 + $0x1a8] sm:$0xff]
    %v1112 = vld [vmem:[#allocation7 + $0x1b0] sm:$0xff]
    %v1113 = vld [vmem:[#allocation7 + $0x1b8] sm:$0xff]
    %v1114 = vld [vmem:[#allocation7 + $0x1c0] sm:$0xff]
    %v1115 = vld [vmem:[#allocation7 + $0x1c8] sm:$0xff]
    %v1116 = vld [vmem:[#allocation7 + $0x1d0] sm:$0xff]
    %v1117 = vld [vmem:[#allocation7 + $0x1d8] sm:$0xff]
    %v1118 = vld [vmem:[#allocation7 + $0x1e0] sm:$0xff]
    %v1119 = vld [vmem:[#allocation7 + $0x1e8] sm:$0xff]
    %v1120 = vld [vmem:[#allocation7 + $0x1f0] sm:$0xff]
    %v1121 = vld [vmem:[#allocation7 + $0x1f8] sm:$0xff]
    %v1122 = vld [vmem:[%s4] sm:$0x3]
    %v1124 = vlaneseq
    %v1125 = vshrl.u32 %v1124, 7
    %v1126 = vsub.s32 0, %v1125
    %v1127 = vrot.slane %v1122, %v1126
    %v1128 = vlaneseq
    %v1129 = vshrl.u32 %v1128, 7
    %v1130 = vsub.s32 1, %v1129
    %v1131 = vrot.slane %v1122, %v1130
    %v1198 = vunpack.c.l.b16 %v1058
    %v1199 = vunpack.c.h.b16 %v1058
    %v1200 = vunpack.c.l.b16 %v1059
    %v1201 = vunpack.c.h.b16 %v1059
    %v1202 = vunpack.c.l.b16 %v1060
    %v1203 = vunpack.c.h.b16 %v1060
    %v1204 = vunpack.c.l.b16 %v1061
    %v1205 = vunpack.c.h.b16 %v1061
    %v1206 = vunpack.c.l.b16 %v1062
    %v1207 = vunpack.c.h.b16 %v1062
    %v1208 = vunpack.c.l.b16 %v1063
    %v1209 = vunpack.c.h.b16 %v1063
    %v1210 = vunpack.c.l.b16 %v1064
    %v1211 = vunpack.c.h.b16 %v1064
    %v1212 = vunpack.c.l.b16 %v1065
    %v1213 = vunpack.c.h.b16 %v1065
    %v1214 = vunpack.c.l.b16 %v1066
    %v1215 = vunpack.c.h.b16 %v1066
    %v1216 = vunpack.c.l.b16 %v1067
    %v1217 = vunpack.c.h.b16 %v1067
    %v1218 = vunpack.c.l.b16 %v1068
    %v1219 = vunpack.c.h.b16 %v1068
    %v1220 = vunpack.c.l.b16 %v1069
    %v1221 = vunpack.c.h.b16 %v1069
    %v1222 = vunpack.c.l.b16 %v1070
    %v1223 = vunpack.c.h.b16 %v1070
    %v1224 = vunpack.c.l.b16 %v1071
    %v1225 = vunpack.c.h.b16 %v1071
    %v1226 = vunpack.c.l.b16 %v1072
    %v1227 = vunpack.c.h.b16 %v1072
    %v1228 = vunpack.c.l.b16 %v1073
    %v1229 = vunpack.c.h.b16 %v1073
    %v1230 = vunpack.c.l.b16 %v1074
    %v1231 = vunpack.c.h.b16 %v1074
    %v1232 = vunpack.c.l.b16 %v1075
    %v1233 = vunpack.c.h.b16 %v1075
    %v1234 = vunpack.c.l.b16 %v1076
    %v1235 = vunpack.c.h.b16 %v1076
    %v1236 = vunpack.c.l.b16 %v1077
    %v1237 = vunpack.c.h.b16 %v1077
    %v1238 = vunpack.c.l.b16 %v1078
    %v1239 = vunpack.c.h.b16 %v1078
    %v1240 = vunpack.c.l.b16 %v1079
    %v1241 = vunpack.c.h.b16 %v1079
    %v1242 = vunpack.c.l.b16 %v1080
    %v1243 = vunpack.c.h.b16 %v1080
    %v1244 = vunpack.c.l.b16 %v1081
    %v1245 = vunpack.c.h.b16 %v1081
    %v1246 = vunpack.c.l.b16 %v1082
    %v1247 = vunpack.c.h.b16 %v1082
    %v1248 = vunpack.c.l.b16 %v1083
    %v1249 = vunpack.c.h.b16 %v1083
    %v1250 = vunpack.c.l.b16 %v1084
    %v1251 = vunpack.c.h.b16 %v1084
    %v1252 = vunpack.c.l.b16 %v1085
    %v1253 = vunpack.c.h.b16 %v1085
    %v1254 = vunpack.c.l.b16 %v1086
    %v1255 = vunpack.c.h.b16 %v1086
    %v1256 = vunpack.c.l.b16 %v1087
    %v1257 = vunpack.c.h.b16 %v1087
    %v1258 = vunpack.c.l.b16 %v1088
    %v1259 = vunpack.c.h.b16 %v1088
    %v1260 = vunpack.c.l.b16 %v1089
    %v1261 = vunpack.c.h.b16 %v1089
    %v1262 = vunpack.c.l.b16 %v1090
    %v1263 = vunpack.c.h.b16 %v1090
    %v1264 = vunpack.c.l.b16 %v1091
    %v1265 = vunpack.c.h.b16 %v1091
    %v1266 = vunpack.c.l.b16 %v1092
    %v1267 = vunpack.c.h.b16 %v1092
    %v1268 = vunpack.c.l.b16 %v1093
    %v1269 = vunpack.c.h.b16 %v1093
    %v1270 = vunpack.c.l.b16 %v1094
    %v1271 = vunpack.c.h.b16 %v1094
    %v1272 = vunpack.c.l.b16 %v1095
    %v1273 = vunpack.c.h.b16 %v1095
    %v1274 = vunpack.c.l.b16 %v1096
    %v1275 = vunpack.c.h.b16 %v1096
    %v1276 = vunpack.c.l.b16 %v1097
    %v1277 = vunpack.c.h.b16 %v1097
    %v1278 = vunpack.c.l.b16 %v1098
    %v1279 = vunpack.c.h.b16 %v1098
    %v1280 = vunpack.c.l.b16 %v1099
    %v1281 = vunpack.c.h.b16 %v1099
    %v1282 = vunpack.c.l.b16 %v1100
    %v1283 = vunpack.c.h.b16 %v1100
    %v1284 = vunpack.c.l.b16 %v1101
    %v1285 = vunpack.c.h.b16 %v1101
    %v1286 = vunpack.c.l.b16 %v1102
    %v1287 = vunpack.c.h.b16 %v1102
    %v1288 = vunpack.c.l.b16 %v1103
    %v1289 = vunpack.c.h.b16 %v1103
    %v1290 = vunpack.c.l.b16 %v1104
    %v1291 = vunpack.c.h.b16 %v1104
    %v1292 = vunpack.c.l.b16 %v1105
    %v1293 = vunpack.c.h.b16 %v1105
    %v1294 = vunpack.c.l.b16 %v1106
    %v1295 = vunpack.c.h.b16 %v1106
    %v1296 = vunpack.c.l.b16 %v1107
    %v1297 = vunpack.c.h.b16 %v1107
    %v1298 = vunpack.c.l.b16 %v1108
    %v1299 = vunpack.c.h.b16 %v1108
    %v1300 = vunpack.c.l.b16 %v1109
    %v1301 = vunpack.c.h.b16 %v1109
    %v1302 = vunpack.c.l.b16 %v1110
    %v1303 = vunpack.c.h.b16 %v1110
    %v1304 = vunpack.c.l.b16 %v1111
    %v1305 = vunpack.c.h.b16 %v1111
    %v1306 = vunpack.c.l.b16 %v1112
    %v1307 = vunpack.c.h.b16 %v1112
    %v1308 = vunpack.c.l.b16 %v1113
    %v1309 = vunpack.c.h.b16 %v1113
    %v1310 = vunpack.c.l.b16 %v1114
    %v1311 = vunpack.c.h.b16 %v1114
    %v1312 = vunpack.c.l.b16 %v1115
    %v1313 = vunpack.c.h.b16 %v1115
    %v1314 = vunpack.c.l.b16 %v1116
    %v1315 = vunpack.c.h.b16 %v1116
    %v1316 = vunpack.c.l.b16 %v1117
    %v1317 = vunpack.c.h.b16 %v1117
    %v1318 = vunpack.c.l.b16 %v1118
    %v1319 = vunpack.c.h.b16 %v1118
    %v1320 = vunpack.c.l.b16 %v1119
    %v1321 = vunpack.c.h.b16 %v1119
    %v1322 = vunpack.c.l.b16 %v1120
    %v1323 = vunpack.c.h.b16 %v1120
    %v1324 = vunpack.c.l.b16 %v1121
    %v1325 = vunpack.c.h.b16 %v1121
    %v1326 = vpack.c.b16 %v1200, %v1198
    %v1327 = vpack.c.b16 %v1201, %v1199
    %v1328 = vpack.c.b16 %v1204, %v1202
    %v1329 = vpack.c.b16 %v1205, %v1203
    %v1330 = vpack.c.b16 %v1208, %v1206
    %v1331 = vpack.c.b16 %v1209, %v1207
    %v1332 = vpack.c.b16 %v1212, %v1210
    %v1333 = vpack.c.b16 %v1213, %v1211
    %v1334 = vpack.c.b16 %v1216, %v1214
    %v1335 = vpack.c.b16 %v1217, %v1215
    %v1336 = vpack.c.b16 %v1220, %v1218
    %v1337 = vpack.c.b16 %v1221, %v1219
    %v1338 = vpack.c.b16 %v1224, %v1222
    %v1339 = vpack.c.b16 %v1225, %v1223
    %v1340 = vpack.c.b16 %v1228, %v1226
    %v1341 = vpack.c.b16 %v1229, %v1227
    %v1342 = vpack.c.b16 %v1232, %v1230
    %v1343 = vpack.c.b16 %v1233, %v1231
    %v1344 = vpack.c.b16 %v1236, %v1234
    %v1345 = vpack.c.b16 %v1237, %v1235
    %v1346 = vpack.c.b16 %v1240, %v1238
    %v1347 = vpack.c.b16 %v1241, %v1239
    %v1348 = vpack.c.b16 %v1244, %v1242
    %v1349 = vpack.c.b16 %v1245, %v1243
    %v1350 = vpack.c.b16 %v1248, %v1246
    %v1351 = vpack.c.b16 %v1249, %v1247
    %v1352 = vpack.c.b16 %v1252, %v1250
    %v1353 = vpack.c.b16 %v1253, %v1251
    %v1354 = vpack.c.b16 %v1256, %v1254
    %v1355 = vpack.c.b16 %v1257, %v1255
    %v1356 = vpack.c.b16 %v1260, %v1258
    %v1357 = vpack.c.b16 %v1261, %v1259
    %v1358 = vpack.c.b16 %v1264, %v1262
    %v1359 = vpack.c.b16 %v1265, %v1263
    %v1360 = vpack.c.b16 %v1268, %v1266
    %v1361 = vpack.c.b16 %v1269, %v1267
    %v1362 = vpack.c.b16 %v1272, %v1270
    %v1363 = vpack.c.b16 %v1273, %v1271
    %v1364 = vpack.c.b16 %v1276, %v1274
    %v1365 = vpack.c.b16 %v1277, %v1275
    %v1366 = vpack.c.b16 %v1280, %v1278
    %v1367 = vpack.c.b16 %v1281, %v1279
    %v1368 = vpack.c.b16 %v1284, %v1282
    %v1369 = vpack.c.b16 %v1285, %v1283
    %v1370 = vpack.c.b16 %v1288, %v1286
    %v1371 = vpack.c.b16 %v1289, %v1287
    %v1372 = vpack.c.b16 %v1292, %v1290
    %v1373 = vpack.c.b16 %v1293, %v1291
    %v1374 = vpack.c.b16 %v1296, %v1294
    %v1375 = vpack.c.b16 %v1297, %v1295
    %v1376 = vpack.c.b16 %v1300, %v1298
    %v1377 = vpack.c.b16 %v1301, %v1299
    %v1378 = vpack.c.b16 %v1304, %v1302
    %v1379 = vpack.c.b16 %v1305, %v1303
    %v1380 = vpack.c.b16 %v1308, %v1306
    %v1381 = vpack.c.b16 %v1309, %v1307
    %v1382 = vpack.c.b16 %v1312, %v1310
    %v1383 = vpack.c.b16 %v1313, %v1311
    %v1384 = vpack.c.b16 %v1316, %v1314
    %v1385 = vpack.c.b16 %v1317, %v1315
    %v1386 = vpack.c.b16 %v1320, %v1318
    %v1387 = vpack.c.b16 %v1321, %v1319
    %v1388 = vpack.c.b16 %v1324, %v1322
    %v1389 = vpack.c.b16 %v1325, %v1323
    %1454 = vmatprep.subr.bf16.mxu0 %v1327
    %1455 = vmatpush1.bf16.msra.mxu0 %v1326
    %1456 = vmatprep.subr.bf16.mxu0 %v1329
    %1457 = vmatpush1.bf16.msra.mxu0 %v1328
    %1458 = vmatprep.subr.bf16.mxu0 %v1331
    %1459 = vmatpush1.bf16.msra.mxu0 %v1330
    %1460 = vmatprep.subr.bf16.mxu0 %v1333
    %1461 = vmatpush1.bf16.msra.mxu0 %v1332
    %1462 = vmatprep.subr.bf16.mxu0 %v1335
    %1463 = vmatpush1.bf16.msra.mxu0 %v1334
    %1464 = vmatprep.subr.bf16.mxu0 %v1337
    %1465 = vmatpush1.bf16.msra.mxu0 %v1336
    %1466 = vmatprep.subr.bf16.mxu0 %v1339
    %1467 = vmatpush1.bf16.msra.mxu0 %v1338
    %1468 = vmatprep.subr.bf16.mxu0 %v1341
    %1469 = vmatpush1.bf16.msra.mxu0 %v1340
    %1470 = vmatprep.subr.bf16.mxu0 %v1343
    %1471 = vmatpush1.bf16.msra.mxu0 %v1342
    %1472 = vmatprep.subr.bf16.mxu0 %v1345
    %1473 = vmatpush1.bf16.msra.mxu0 %v1344
    %1474 = vmatprep.subr.bf16.mxu0 %v1347
    %1475 = vmatpush1.bf16.msra.mxu0 %v1346
    %1476 = vmatprep.subr.bf16.mxu0 %v1349
    %1477 = vmatpush1.bf16.msra.mxu0 %v1348
    %1478 = vmatprep.subr.bf16.mxu0 %v1351
    %1479 = vmatpush1.bf16.msra.mxu0 %v1350
    %1480 = vmatprep.subr.bf16.mxu0 %v1353
    %1481 = vmatpush1.bf16.msra.mxu0 %v1352
    %1482 = vmatprep.subr.bf16.mxu0 %v1355
    %1483 = vmatpush1.bf16.msra.mxu0 %v1354
    %1484 = vmatprep.subr.bf16.mxu0 %v1357
    %1485 = vmatpush1.bf16.msra.mxu0 %v1356
    %1486 = vmatprep.mubr.bf16.mxu0 %v1055
    %1487 = vmatmul.mubr.bf16.gmra.mrb[0].mxu0 %v1054
    %v1488 = vpop.f32.mrb[0].mxu0
    %v1489 = vadd.f32 %v1127, %v1488
    %v1490 = vpop.f32.mrb[0].mxu0
    %v1491 = vadd.f32 %v1131, %v1490
    %v1492 = vpop.f32.mrb[0].mxu0
    %v1493 = vpop.f32.mrb[0].mxu0
    %1494 = vdwg.mxu0
    %1495 = vmatprep.subr.bf16.mxu0 %v1359
    %1496 = vmatpush1.bf16.msra.mxu0 %v1358
    %1497 = vmatprep.subr.bf16.mxu0 %v1361
    %1498 = vmatpush1.bf16.msra.mxu0 %v1360
    %1499 = vmatprep.subr.bf16.mxu0 %v1363
    %1500 = vmatpush1.bf16.msra.mxu0 %v1362
    %1501 = vmatprep.subr.bf16.mxu0 %v1365
    %1502 = vmatpush1.bf16.msra.mxu0 %v1364
    %1503 = vmatprep.subr.bf16.mxu0 %v1367
    %1504 = vmatpush1.bf16.msra.mxu0 %v1366
    %1505 = vmatprep.subr.bf16.mxu0 %v1369
    %1506 = vmatpush1.bf16.msra.mxu0 %v1368
    %1507 = vmatprep.subr.bf16.mxu0 %v1371
    %1508 = vmatpush1.bf16.msra.mxu0 %v1370
    %1509 = vmatprep.subr.bf16.mxu0 %v1373
    %1510 = vmatpush1.bf16.msra.mxu0 %v1372
    %1511 = vmatprep.subr.bf16.mxu0 %v1375
    %1512 = vmatpush1.bf16.msra.mxu0 %v1374
    %1513 = vmatprep.subr.bf16.mxu0 %v1377
    %1514 = vmatpush1.bf16.msra.mxu0 %v1376
    %1515 = vmatprep.subr.bf16.mxu0 %v1379
    %1516 = vmatpush1.bf16.msra.mxu0 %v1378
    %1517 = vmatprep.subr.bf16.mxu0 %v1381
    %1518 = vmatpush1.bf16.msra.mxu0 %v1380
    %1519 = vmatprep.subr.bf16.mxu0 %v1383
    %1520 = vmatpush1.bf16.msra.mxu0 %v1382
    %1521 = vmatprep.subr.bf16.mxu0 %v1385
    %1522 = vmatpush1.bf16.msra.mxu0 %v1384
    %1523 = vmatprep.subr.bf16.mxu0 %v1387
    %1524 = vmatpush1.bf16.msra.mxu0 %v1386
    %1525 = vmatprep.subr.bf16.mxu0 %v1389
    %1526 = vmatpush1.bf16.msra.mxu0 %v1388
    %1527 = vmatprep.mubr.bf16.mxu0 %v1057
    %1528 = vmatmul.mubr.bf16.gmra.mrb[0].mxu0 %v1056
    %v1529 = vpop.f32.mrb[0].mxu0
    %v1530 = vadd.f32 %v1489, %v1529
    %v1531 = vpop.f32.mrb[0].mxu0
    %v1532 = vadd.f32 %v1491, %v1531
    %v1533 = vpop.f32.mrb[0].mxu0
    %v1534 = vpop.f32.mrb[0].mxu0
    %1535 = vdwg.mxu0
    %v1536 = vmax.f32 %v1530, 0.0
    %v1537 = vmax.f32 %v1532, 0.0
    %v1538 = vpack.c.bf16 %v1536, %v1536
    %v1539 = vpack.c.bf16 %v1537, %v1537
    %v1540 = vld [vmem:[#allocation8] sm:$0xff]
    %v1541 = vld [vmem:[#allocation8 + $0x8] sm:$0xff]
    %v1542 = vld [vmem:[#allocation8 + $0x10] sm:$0xff]
    %v1543 = vld [vmem:[#allocation8 + $0x18] sm:$0xff]
    %v1544 = vld [vmem:[#allocation8 + $0x20] sm:$0xff]
    %v1545 = vld [vmem:[#allocation8 + $0x28] sm:$0xff]
    %v1546 = vld [vmem:[#allocation8 + $0x30] sm:$0xff]
    %v1547 = vld [vmem:[#allocation8 + $0x38] sm:$0xff]
    %v1548 = vld [vmem:[#allocation8 + $0x40] sm:$0xff]
    %v1549 = vld [vmem:[#allocation8 + $0x48] sm:$0xff]
    %v1550 = vld [vmem:[#allocation8 + $0x50] sm:$0xff]
    %v1551 = vld [vmem:[#allocation8 + $0x58] sm:$0xff]
    %v1552 = vld [vmem:[#allocation8 + $0x60] sm:$0xff]
    %v1553 = vld [vmem:[#allocation8 + $0x68] sm:$0xff]
    %v1554 = vld [vmem:[#allocation8 + $0x70] sm:$0xff]
    %v1555 = vld [vmem:[#allocation8 + $0x78] sm:$0xff]
    %v1556 = vld [vmem:[#allocation8 + $0x80] sm:$0xff]
    %v1557 = vld [vmem:[#allocation8 + $0x88] sm:$0xff]
    %v1558 = vld [vmem:[#allocation8 + $0x90] sm:$0xff]
    %v1559 = vld [vmem:[#allocation8 + $0x98] sm:$0xff]
    %v1560 = vld [vmem:[#allocation8 + $0xa0] sm:$0xff]
    %v1561 = vld [vmem:[#allocation8 + $0xa8] sm:$0xff]
    %v1562 = vld [vmem:[#allocation8 + $0xb0] sm:$0xff]
    %v1563 = vld [vmem:[#allocation8 + $0xb8] sm:$0xff]
    %v1564 = vld [vmem:[#allocation8 + $0xc0] sm:$0xff]
    %v1565 = vld [vmem:[#allocation8 + $0xc8] sm:$0xff]
    %v1566 = vld [vmem:[#allocation8 + $0xd0] sm:$0xff]
    %v1567 = vld [vmem:[#allocation8 + $0xd8] sm:$0xff]
    %v1568 = vld [vmem:[#allocation8 + $0xe0] sm:$0xff]
    %v1569 = vld [vmem:[#allocation8 + $0xe8] sm:$0xff]
    %v1570 = vld [vmem:[#allocation8 + $0xf0] sm:$0xff]
    %v1571 = vld [vmem:[#allocation8 + $0xf8] sm:$0xff]
    %v1572 = vld [vmem:[%s6] sm:$0x3]
    %v1574 = vlaneseq
    %v1575 = vshrl.u32 %v1574, 7
    %v1576 = vsub.s32 0, %v1575
    %v1577 = vrot.slane %v1572, %v1576
    %v1578 = vlaneseq
    %v1579 = vshrl.u32 %v1578, 7
    %v1580 = vsub.s32 1, %v1579
    %v1581 = vrot.slane %v1572, %v1580
    %v1616 = vunpack.c.l.b16 %v1540
    %v1617 = vunpack.c.h.b16 %v1540
    %v1618 = vunpack.c.l.b16 %v1541
    %v1619 = vunpack.c.h.b16 %v1541
    %v1620 = vunpack.c.l.b16 %v1542
    %v1621 = vunpack.c.h.b16 %v1542
    %v1622 = vunpack.c.l.b16 %v1543
    %v1623 = vunpack.c.h.b16 %v1543
    %v1624 = vunpack.c.l.b16 %v1544
    %v1625 = vunpack.c.h.b16 %v1544
    %v1626 = vunpack.c.l.b16 %v1545
    %v1627 = vunpack.c.h.b16 %v1545
    %v1628 = vunpack.c.l.b16 %v1546
    %v1629 = vunpack.c.h.b16 %v1546
    %v1630 = vunpack.c.l.b16 %v1547
    %v1631 = vunpack.c.h.b16 %v1547
    %v1632 = vunpack.c.l.b16 %v1548
    %v1633 = vunpack.c.h.b16 %v1548
    %v1634 = vunpack.c.l.b16 %v1549
    %v1635 = vunpack.c.h.b16 %v1549
    %v1636 = vunpack.c.l.b16 %v1550
    %v1637 = vunpack.c.h.b16 %v1550
    %v1638 = vunpack.c.l.b16 %v1551
    %v1639 = vunpack.c.h.b16 %v1551
    %v1640 = vunpack.c.l.b16 %v1552
    %v1641 = vunpack.c.h.b16 %v1552
    %v1642 = vunpack.c.l.b16 %v1553
    %v1643 = vunpack.c.h.b16 %v1553
    %v1644 = vunpack.c.l.b16 %v1554
    %v1645 = vunpack.c.h.b16 %v1554
    %v1646 = vunpack.c.l.b16 %v1555
    %v1647 = vunpack.c.h.b16 %v1555
    %v1648 = vunpack.c.l.b16 %v1556
    %v1649 = vunpack.c.h.b16 %v1556
    %v1650 = vunpack.c.l.b16 %v1557
    %v1651 = vunpack.c.h.b16 %v1557
    %v1652 = vunpack.c.l.b16 %v1558
    %v1653 = vunpack.c.h.b16 %v1558
    %v1654 = vunpack.c.l.b16 %v1559
    %v1655 = vunpack.c.h.b16 %v1559
    %v1656 = vunpack.c.l.b16 %v1560
    %v1657 = vunpack.c.h.b16 %v1560
    %v1658 = vunpack.c.l.b16 %v1561
    %v1659 = vunpack.c.h.b16 %v1561
    %v1660 = vunpack.c.l.b16 %v1562
    %v1661 = vunpack.c.h.b16 %v1562
    %v1662 = vunpack.c.l.b16 %v1563
    %v1663 = vunpack.c.h.b16 %v1563
    %v1664 = vunpack.c.l.b16 %v1564
    %v1665 = vunpack.c.h.b16 %v1564
    %v1666 = vunpack.c.l.b16 %v1565
    %v1667 = vunpack.c.h.b16 %v1565
    %v1668 = vunpack.c.l.b16 %v1566
    %v1669 = vunpack.c.h.b16 %v1566
    %v1670 = vunpack.c.l.b16 %v1567
    %v1671 = vunpack.c.h.b16 %v1567
    %v1672 = vunpack.c.l.b16 %v1568
    %v1673 = vunpack.c.h.b16 %v1568
    %v1674 = vunpack.c.l.b16 %v1569
    %v1675 = vunpack.c.h.b16 %v1569
    %v1676 = vunpack.c.l.b16 %v1570
    %v1677 = vunpack.c.h.b16 %v1570
    %v1678 = vunpack.c.l.b16 %v1571
    %v1679 = vunpack.c.h.b16 %v1571
    %v1680 = vpack.c.b16 %v1618, %v1616
    %v1681 = vpack.c.b16 %v1619, %v1617
    %v1682 = vpack.c.b16 %v1622, %v1620
    %v1683 = vpack.c.b16 %v1623, %v1621
    %v1684 = vpack.c.b16 %v1626, %v1624
    %v1685 = vpack.c.b16 %v1627, %v1625
    %v1686 = vpack.c.b16 %v1630, %v1628
    %v1687 = vpack.c.b16 %v1631, %v1629
    %v1688 = vpack.c.b16 %v1634, %v1632
    %v1689 = vpack.c.b16 %v1635, %v1633
    %v1690 = vpack.c.b16 %v1638, %v1636
    %v1691 = vpack.c.b16 %v1639, %v1637
    %v1692 = vpack.c.b16 %v1642, %v1640
    %v1693 = vpack.c.b16 %v1643, %v1641
    %v1694 = vpack.c.b16 %v1646, %v1644
    %v1695 = vpack.c.b16 %v1647, %v1645
    %v1696 = vpack.c.b16 %v1650, %v1648
    %v1697 = vpack.c.b16 %v1651, %v1649
    %v1698 = vpack.c.b16 %v1654, %v1652
    %v1699 = vpack.c.b16 %v1655, %v1653
    %v1700 = vpack.c.b16 %v1658, %v1656
    %v1701 = vpack.c.b16 %v1659, %v1657
    %v1702 = vpack.c.b16 %v1662, %v1660
    %v1703 = vpack.c.b16 %v1663, %v1661
    %v1704 = vpack.c.b16 %v1666, %v1664
    %v1705 = vpack.c.b16 %v1667, %v1665
    %v1706 = vpack.c.b16 %v1670, %v1668
    %v1707 = vpack.c.b16 %v1671, %v1669
    %v1708 = vpack.c.b16 %v1674, %v1672
    %v1709 = vpack.c.b16 %v1675, %v1673
    %v1710 = vpack.c.b16 %v1678, %v1676
    %v1711 = vpack.c.b16 %v1679, %v1677
    %1744 = vmatprep.subr.bf16.mxu0 %v1681
    %1745 = vmatpush1.bf16.msra.mxu0 %v1680
    %1746 = vmatprep.subr.bf16.mxu0 %v1683
    %1747 = vmatpush1.bf16.msra.mxu0 %v1682
    %1748 = vmatprep.subr.bf16.mxu0 %v1685
    %1749 = vmatpush1.bf16.msra.mxu0 %v1684
    %1750 = vmatprep.subr.bf16.mxu0 %v1687
    %1751 = vmatpush1.bf16.msra.mxu0 %v1686
    %1752 = vmatprep.subr.bf16.mxu0 %v1689
    %1753 = vmatpush1.bf16.msra.mxu0 %v1688
    %1754 = vmatprep.subr.bf16.mxu0 %v1691
    %1755 = vmatpush1.bf16.msra.mxu0 %v1690
    %1756 = vmatprep.subr.bf16.mxu0 %v1693
    %1757 = vmatpush1.bf16.msra.mxu0 %v1692
    %1758 = vmatprep.subr.bf16.mxu0 %v1695
    %1759 = vmatpush1.bf16.msra.mxu0 %v1694
    %1760 = vmatprep.subr.bf16.mxu0 %v1697
    %1761 = vmatpush1.bf16.msra.mxu0 %v1696
    %1762 = vmatprep.subr.bf16.mxu0 %v1699
    %1763 = vmatpush1.bf16.msra.mxu0 %v1698
    %1764 = vmatprep.subr.bf16.mxu0 %v1701
    %1765 = vmatpush1.bf16.msra.mxu0 %v1700
    %1766 = vmatprep.subr.bf16.mxu0 %v1703
    %1767 = vmatpush1.bf16.msra.mxu0 %v1702
    %1768 = vmatprep.subr.bf16.mxu0 %v1705
    %1769 = vmatpush1.bf16.msra.mxu0 %v1704
    %1770 = vmatprep.subr.bf16.mxu0 %v1707
    %1771 = vmatpush1.bf16.msra.mxu0 %v1706
    %1772 = vmatprep.subr.bf16.mxu0 %v1709
    %1773 = vmatpush1.bf16.msra.mxu0 %v1708
    %1774 = vmatprep.subr.bf16.mxu0 %v1711
    %1775 = vmatpush1.bf16.msra.mxu0 %v1710
    %1776 = vmatprep.mubr.bf16.mxu0 %v1539
    %1777 = vmatmul.mubr.bf16.gmra.mrb[0].mxu0 %v1538
    %v1778 = vpop.f32.mrb[0].mxu0
    %v1779 = vadd.f32 %v1577, %v1778
    %v1780 = vpop.f32.mrb[0].mxu0
    %v1781 = vadd.f32 %v1581, %v1780
    %v1782 = vpop.f32.mrb[0].mxu0
    %v1783 = vpop.f32.mrb[0].mxu0
    %1784 = vdwg.mxu0
    %1785 = vst [vmem:[#allocation10] sm:$0xff] %v1779
    %1786 = vst [vmem:[#allocation10 + $0x8] sm:$0xff] %v1781
    // Predicated region
    $region46: #{tpu_custom_call.1} parent=1 // pred_check
      _
    $region47: #{tpu_custom_call.1} parent=1 // pred_check_branch
      %1788 = sbr.rel (0) target = $region49
    $region48: #{tpu_custom_call.1} parent=1 // pred_region
      %s1790 = ssub.s32 256, 256
      %1791 = vsyncadd [#allocation4], %s1790
      %s1793 = sshll.u32 [#allocation10], 4
      %s1794 = int_to_ptr.vmem [resolvable:$true] %s1793
      %1796 = dma.vmem_to_hbm [thread:$0]  %s1794, 256, %s7, [#allocation4]
    $region49: #{tpu_custom_call.1} parent=1 // pred_fallthru
      _
    // Predicated region
    $region50: #{tpu_custom_call.1} parent=1 // pred_check
      _
    $region51: #{tpu_custom_call.1} parent=1 // pred_check_branch
      %1798 = sbr.rel (0) target = $region53
    $region52: #{tpu_custom_call.1} parent=1 // pred_region
      %1799 = dma.done [#allocation4], 256
    $region53: #{tpu_custom_call.1} parent=1 // pred_fallthru
      _
    %1800 = vsyncpa [#allocation3], 1
    %1801 = vsyncpa [#allocation6], 1
    %1802 = vsyncpa [#allocation9], 1
    %1803 = vsyncpa [#allocation4], 1

</llo_original>
